<compile_context>
chip_gen: v7x
topology: tpu7x:2x2x1
jax: 0.10.0
libtpu: 0.0.40
codegen_flags: <defaults>
</compile_context>

<pallas_src>
import functools

import jax
import jax.numpy as jnp
from jax.experimental import pallas as pl
from jax.experimental.pallas import tpu as pltpu


# MXU operand dtype for all in-kernel matmuls (accumulation is always f32 via
# preferred_element_type).  bf16 is native on v5e/v6e/v7x MXUs.
_MXU_DTYPE = jnp.bfloat16

CFG = dict(
    vocab_size=128,
    hidden_size=32,
    num_attention_heads=4,
    intermediate_size=64,
    num_hidden_layers=1,
    max_position_embeddings=64,
    type_vocab_size=2,
    layer_norm_eps=1e-12,
    initializer_range=0.02,
)


# ----------------------------------------------------------------------------
# In-kernel helpers
# ----------------------------------------------------------------------------
def _gelu(x):
    # TODO(synk): tanh-approximation GELU; PyTorch's default "gelu" is exact
    # erf-based -- kept on the tanh EUP path for robust Mosaic lowering.
    return 0.5 * x * (1.0 + jnp.tanh(0.7978845608028654 * (x + 0.044715 * x * x * x)))


def _mm(a, b):
    return jnp.dot(a.astype(_MXU_DTYPE), b.astype(_MXU_DTYPE),
                   preferred_element_type=jnp.float32)


def _bqk(q, k):
    return jnp.einsum("bqd,bkd->bqk", q.astype(_MXU_DTYPE), k.astype(_MXU_DTYPE),
                      preferred_element_type=jnp.float32)


def _bpv(p, v):
    return jnp.einsum("bqk,bkd->bqd", p.astype(_MXU_DTYPE), v.astype(_MXU_DTYPE),
                      preferred_element_type=jnp.float32)


# ----------------------------------------------------------------------------
# Fused Pallas kernel.  grid = (num_batch_tiles, num_layers)
#   * batch-tile axis is "parallel", layer axis is "arbitrary"
#   * one layer's weights streamed per step; hidden state carried in VMEM
# ----------------------------------------------------------------------------
def _bert_fused_kernel(
        emb_ref, mask_ref,
        emb_ln_g_ref, emb_ln_b_ref,
        qkv_w_ref, qkv_b_ref,
        ao_w_ref, ao_b_ref, a_ln_g_ref, a_ln_b_ref,
        fi_w_ref, fi_b_ref, fo_w_ref, fo_b_ref, f_ln_g_ref, f_ln_b_ref,
        cls_w_ref, cls_b_ref, cls_ln_g_ref, cls_ln_b_ref,
        dec_w_ref, dec_b_ref,
        out_ref,
        hid_ref,
        *, num_heads, head_dim, eps):
    hidden_size = num_heads * head_dim
    batch_tile, seq_len, _ = emb_ref.shape
    rows = batch_tile * seq_len
    layer = pl.program_id(1)

    def _layernorm(x, g, b):
        mu = jnp.mean(x, axis=-1, keepdims=True)
        xc = x - mu
        var = jnp.mean(xc * xc, axis=-1, keepdims=True)
        return xc * jax.lax.rsqrt(var + eps) * g + b

    # ---- embedding LayerNorm once per batch tile (first layer step) ----
    @pl.when(layer == 0)
    def _():
        x = emb_ref[...].reshape(rows, hidden_size)
        hid_ref[...] = _layernorm(x, emb_ln_g_ref[...], emb_ln_b_ref[...])

    hidden = hid_ref[...]                                   # (Bt*S, H) f32
    mask = mask_ref[...]                                    # (Bt, 1, S) additive

    # ---- fused QKV: all Bt*S rows in one MXU pass (Q scale pre-folded) ----
    qkv = _mm(hidden, qkv_w_ref[...]) + qkv_b_ref[...]      # (Bt*S, 3H)
    q = qkv[:, :hidden_size].reshape(batch_tile, seq_len, hidden_size)
    k = qkv[:, hidden_size:2 * hidden_size].reshape(batch_tile, seq_len, hidden_size)
    v = qkv[:, 2 * hidden_size:].reshape(batch_tile, seq_len, hidden_size)

    # ---- attention: heads are lane slices, matmuls batched over Bt; W_o is
    #      applied ONCE on the lane-concatenated context (un-folded) ----
    ctx_parts = []
    for h in range(num_heads):
        lo = h * head_dim
        s = _bqk(q[:, :, lo:lo + head_dim], k[:, :, lo:lo + head_dim]) + mask
        m = jnp.max(s, axis=-1, keepdims=True)
        p = jnp.exp(s - m)
        p = p * pl.reciprocal(jnp.sum(p, axis=-1, keepdims=True), approx=True)
        ctx_parts.append(_bpv(p, v[:, :, lo:lo + head_dim]))
    ctx = jnp.concatenate(ctx_parts, axis=-1).reshape(rows, hidden_size)

    attn_out = _mm(ctx, ao_w_ref[...]) + ao_b_ref[...]
    hidden = _layernorm(attn_out + hidden, a_ln_g_ref[...], a_ln_b_ref[...])

    # ---- feed-forward ----
    inter = _gelu(_mm(hidden, fi_w_ref[...]) + fi_b_ref[...])
    ffn_out = _mm(inter, fo_w_ref[...]) + fo_b_ref[...]
    hidden = _layernorm(ffn_out + hidden, f_ln_g_ref[...], f_ln_b_ref[...])
    hid_ref[...] = hidden

    # ---- BertForLMTransformHead + vocab decoder on the last layer step ----
    @pl.when(layer == pl.num_programs(1) - 1)
    def _():
        h2 = _gelu(_mm(hidden, cls_w_ref[...]) + cls_b_ref[...])
        h2 = _layernorm(h2, cls_ln_g_ref[...], cls_ln_b_ref[...])
        scores = _mm(h2, dec_w_ref[...]) + dec_b_ref[...]   # (Bt*S, V) lane-dense
        out_ref[...] = scores.reshape(batch_tile, seq_len, -1).astype(out_ref.dtype)


# ----------------------------------------------------------------------------
# Parameter construction (deterministic, synthetic — no checkpoint loading)
# ----------------------------------------------------------------------------
def init_params(key):
    c = CFG
    H, I, V, L = (c["hidden_size"], c["intermediate_size"],
                  c["vocab_size"], c["num_hidden_layers"])
    std = c["initializer_range"]

    def nrm(k, shape):
        return jax.random.normal(k, shape, dtype=jnp.float32) * std

    keys = iter(jax.random.split(key, 8 + 6 * L))
    p = {}
    p["word_emb"] = nrm(next(keys), (V, H))
    p["pos_emb"] = nrm(next(keys), (c["max_position_embeddings"], H))
    p["tok_emb"] = nrm(next(keys), (c["type_vocab_size"], H))
    p["emb_ln_g"] = jnp.ones((1, H), jnp.float32)
    p["emb_ln_b"] = jnp.zeros((1, H), jnp.float32)

    qkv_w, ao_w, fi_w, fo_w = [], [], [], []
    for _ in range(L):
        qw = nrm(next(keys), (H, H))
        kw = nrm(next(keys), (H, H))
        vw = nrm(next(keys), (H, H))
        qkv_w.append(jnp.concatenate([qw, kw, vw], axis=1))       # fused QKV (H, 3H)
        ao_w.append(nrm(next(keys), (H, H)))
        fi_w.append(nrm(next(keys), (H, I)))
        fo_w.append(nrm(next(keys), (I, H)))
    p["qkv_w"] = jnp.stack(qkv_w)                                 # (L, H, 3H)
    p["qkv_b"] = jnp.zeros((L, 1, 3 * H), jnp.float32)
    p["attn_out_w"] = jnp.stack(ao_w)                             # (L, H, H)
    p["attn_out_b"] = jnp.zeros((L, 1, H), jnp.float32)
    p["attn_ln_g"] = jnp.ones((L, 1, H), jnp.float32)
    p["attn_ln_b"] = jnp.zeros((L, 1, H), jnp.float32)
    p["ffn_in_w"] = jnp.stack(fi_w)                               # (L, H, I)
    p["ffn_in_b"] = jnp.zeros((L, 1, I), jnp.float32)
    p["ffn_out_w"] = jnp.stack(fo_w)                              # (L, I, H)
    p["ffn_out_b"] = jnp.zeros((L, 1, H), jnp.float32)
    p["ffn_ln_g"] = jnp.ones((L, 1, H), jnp.float32)
    p["ffn_ln_b"] = jnp.zeros((L, 1, H), jnp.float32)

    p["cls_dense_w"] = nrm(next(keys), (H, H))
    p["cls_dense_b"] = jnp.zeros((1, H), jnp.float32)
    p["cls_ln_g"] = jnp.ones((1, H), jnp.float32)
    p["cls_ln_b"] = jnp.zeros((1, H), jnp.float32)
    # TODO(synk): decoder weight kept independent (matches this module's
    # standalone nn.Linear decoder); decoder bias = zeros(vocab) per the spec.
    p["dec_w"] = nrm(next(keys), (H, V))
    p["dec_b"] = jnp.zeros((1, V), jnp.float32)
    return p


# ----------------------------------------------------------------------------
# JAX glue
# ----------------------------------------------------------------------------
def _prepare_inputs(params, input_ids, attention_mask, token_type_ids, position_ids):
    B, S = input_ids.shape
    if attention_mask is None:
        attention_mask = jnp.ones((B, S), jnp.float32)
    if token_type_ids is None:
        token_type_ids = jnp.zeros((B, S), jnp.int32)
    if position_ids is None:
        position_ids = jnp.broadcast_to(jnp.arange(S, dtype=jnp.int32), (B, S))
    # TODO(synk): embedding row gather (data-dependent DMA) stays in plain JAX;
    # a PrefetchScalarGridSpec + pl.Element row-gather would fuse it in-kernel.
    we = jnp.take(params["word_emb"], input_ids, axis=0)
    pe = jnp.take(params["pos_emb"], position_ids, axis=0)
    te = jnp.take(params["tok_emb"], token_type_ids, axis=0)
    emb = (we + pe + te).astype(jnp.float32)                               # (B, S, H)
    mask_add = ((1.0 - attention_mask.astype(jnp.float32)) * -10000.0
                ).reshape(B, 1, S)                                         # (B, 1, S)
    return emb, mask_add


def _kernel_weights(params):
    """Cast MXU operand weights to bf16 once; fold 1/sqrt(head_dim) into the
    Q columns (weights AND bias) of the fused QKV projection."""
    c = CFG
    H = c["hidden_size"]
    dH = H // c["num_attention_heads"]
    scale = 1.0 / float(dH) ** 0.5
    qkv_w = params["qkv_w"].at[:, :, :H].multiply(scale).astype(_MXU_DTYPE)
    qkv_b = params["qkv_b"].at[:, :, :H].multiply(scale)      # stays f32 (post-acc add)
    return dict(
        qkv_w=qkv_w, qkv_b=qkv_b,
        ao_w=params["attn_out_w"].astype(_MXU_DTYPE),
        fi_w=params["ffn_in_w"].astype(_MXU_DTYPE),
        fo_w=params["ffn_out_w"].astype(_MXU_DTYPE),
        cls_w=params["cls_dense_w"].astype(_MXU_DTYPE),
        dec_w=params["dec_w"].astype(_MXU_DTYPE),
    )


@jax.jit
def bert_for_masked_lm(params, input_ids, attention_mask=None,
                       token_type_ids=None, position_ids=None):
    c = CFG
    B, S = input_ids.shape
    H, V, L = c["hidden_size"], c["vocab_size"], c["num_hidden_layers"]
    nH = c["num_attention_heads"]
    dH = H // nH

    emb, mask_add = _prepare_inputs(params, input_ids, attention_mask,
                                    token_type_ids, position_ids)
    kw = _kernel_weights(params)

    # batch tile: largest divisor of B up to 8 -> raises MXU M = Bt*S per step
    Bt = max(d for d in range(1, min(B, 8) + 1) if B % d == 0)

    inputs = (
        emb, mask_add,
        params["emb_ln_g"], params["emb_ln_b"],
        kw["qkv_w"], kw["qkv_b"],
        kw["ao_w"], params["attn_out_b"], params["attn_ln_g"], params["attn_ln_b"],
        kw["fi_w"], params["ffn_in_b"], kw["fo_w"], params["ffn_out_b"],
        params["ffn_ln_g"], params["ffn_ln_b"],
        kw["cls_w"], params["cls_dense_b"], params["cls_ln_g"], params["cls_ln_b"],
        kw["dec_w"], params["dec_b"],
    )

    def batched_spec(shape):
        # Bt batch elements per grid step; constant across the layer axis
        return pl.BlockSpec((Bt,) + tuple(shape[1:]),
                            lambda bi, li: (bi,) + (0,) * (len(shape) - 1))

    def layer_spec(shape):
        # stream ONE layer's weights per layer-axis step (leading L dim squeezed)
        return pl.BlockSpec((None,) + tuple(shape[1:]),
                            lambda bi, li: (li,) + (0,) * (len(shape) - 1))

    def const_spec(shape):
        # grid-invariant block: DMA'd once, stays resident in VMEM
        return pl.BlockSpec(tuple(shape), lambda bi, li: (0,) * len(shape))

    in_specs = [batched_spec(emb.shape), batched_spec(mask_add.shape)]
    in_specs += [const_spec(inputs[i].shape) for i in (2, 3)]
    in_specs += [layer_spec(inputs[i].shape) for i in range(4, 16)]
    in_specs += [const_spec(inputs[i].shape) for i in range(16, 22)]

    kernel = functools.partial(
        _bert_fused_kernel, num_heads=nH, head_dim=dH, eps=c["layer_norm_eps"])

    return pl.pallas_call(
        kernel,
        grid=(B // Bt, L),
        in_specs=in_specs,
        out_specs=pl.BlockSpec((Bt, S, V), lambda bi, li: (bi, 0, 0)),
        out_shape=jax.ShapeDtypeStruct((B, S, V), jnp.float32),
        scratch_shapes=[pltpu.VMEM((Bt * S, H), jnp.float32)],   # hidden carry
        compiler_params=pltpu.CompilerParams(
            dimension_semantics=("parallel", "arbitrary"),
            vmem_limit_bytes=48 * 1024 * 1024),
    )(*inputs)


# ----------------------------------------------------------------------------
# Pure-JAX reference (same math, f32 weights, exact softmax division)
# ----------------------------------------------------------------------------
def _bert_reference(params, emb, mask_add):
    c = CFG
    H, nH = c["hidden_size"], c["num_attention_heads"]
    dH = H // nH
    eps = c["layer_norm_eps"]
    scale = 1.0 / float(dH) ** 0.5

    def ln(x, g, b):
        mu = jnp.mean(x, axis=-1, keepdims=True)
        xc = x - mu
        var = jnp.mean(xc * xc, axis=-1, keepdims=True)
        return xc * jax.lax.rsqrt(var + eps) * g + b

    B, S, _ = emb.shape
    h = ln(emb, params["emb_ln_g"], params["emb_ln_b"])
    for l in range(c["num_hidden_layers"]):
        qkv = h @ params["qkv_w"][l] + params["qkv_b"][l]
        q = (qkv[..., :H] * scale).reshape(B, S, nH, dH).transpose(0, 2, 1, 3)
        k = qkv[..., H:2 * H].reshape(B, S, nH, dH).transpose(0, 2, 1, 3)
        v = qkv[..., 2 * H:].reshape(B, S, nH, dH).transpose(0, 2, 1, 3)
        s = jnp.einsum("bhqd,bhkd->bhqk", q, k) + mask_add[:, None, :, :]
        p = jax.nn.softmax(s, axis=-1)
        ctx = jnp.einsum("bhqk,bhkd->bhqd", p, v).transpose(0, 2, 1, 3).reshape(B, S, H)
        attn = ctx @ params["attn_out_w"][l] + params["attn_out_b"][l]
        h = ln(attn + h, params["attn_ln_g"][l], params["attn_ln_b"][l])
        inter = _gelu(h @ params["ffn_in_w"][l] + params["ffn_in_b"][l])
        ffn = inter @ params["ffn_out_w"][l] + params["ffn_out_b"][l]
        h = ln(ffn + h, params["ffn_ln_g"][l], params["ffn_ln_b"][l])
    h2 = _gelu(h @ params["cls_dense_w"] + params["cls_dense_b"])
    h2 = ln(h2, params["cls_ln_g"], params["cls_ln_b"])
    return h2 @ params["dec_w"] + params["dec_b"]


# ----------------------------------------------------------------------------
if __name__ == "__main__":
    key = jax.random.PRNGKey(0)
    pkey, dkey = jax.random.split(key)
    params = init_params(pkey)

    B, S = 2, 8
    input_ids = jax.random.randint(dkey, (B, S), 0, CFG["vocab_size"], dtype=jnp.int32)
    attention_mask = jnp.ones((B, S), jnp.float32)
    token_type_ids = jnp.zeros((B, S), jnp.int32)

    scores = bert_for_masked_lm(params, input_ids, attention_mask, token_type_ids)
    scores = jax.block_until_ready(scores)

    assert scores.shape == (B, S, CFG["vocab_size"])
    assert scores.dtype == jnp.float32

    # sanity check vs pure-JAX f32 reference (tolerance covers bf16 MXU
    # operands and the approx softmax reciprocal)
    emb, mask_add = _prepare_inputs(params, input_ids, attention_mask,
                                    token_type_ids, None)
    ref = _bert_reference(params, emb, mask_add)
    max_err = float(jnp.max(jnp.abs(scores - ref)))
    assert max_err < 2e-2, f"kernel/reference mismatch: max_err={max_err}"

    print("KERNEL_OK")
</pallas_src>

<mosaic_0001>
module attributes {stable_mosaic.version = 11 : i64} {
  func.func @_bert_fused_kernel(%arg0: i32, %arg1: i32, %arg2: memref<2x8x32xf32, #tpu.memory_space<vmem>>, %arg3: memref<2x1x8xf32, #tpu.memory_space<vmem>>, %arg4: memref<1x32xf32, #tpu.memory_space<vmem>>, %arg5: memref<1x32xf32, #tpu.memory_space<vmem>>, %arg6: memref<1x32x96xbf16, #tpu.memory_space<vmem>>, %arg7: memref<1x1x96xf32, #tpu.memory_space<vmem>>, %arg8: memref<1x32x32xbf16, #tpu.memory_space<vmem>>, %arg9: memref<1x1x32xf32, #tpu.memory_space<vmem>>, %arg10: memref<1x1x32xf32, #tpu.memory_space<vmem>>, %arg11: memref<1x1x32xf32, #tpu.memory_space<vmem>>, %arg12: memref<1x32x64xbf16, #tpu.memory_space<vmem>>, %arg13: memref<1x1x64xf32, #tpu.memory_space<vmem>>, %arg14: memref<1x64x32xbf16, #tpu.memory_space<vmem>>, %arg15: memref<1x1x32xf32, #tpu.memory_space<vmem>>, %arg16: memref<1x1x32xf32, #tpu.memory_space<vmem>>, %arg17: memref<1x1x32xf32, #tpu.memory_space<vmem>>, %arg18: memref<32x32xbf16, #tpu.memory_space<vmem>>, %arg19: memref<1x32xf32, #tpu.memory_space<vmem>>, %arg20: memref<1x32xf32, #tpu.memory_space<vmem>>, %arg21: memref<1x32xf32, #tpu.memory_space<vmem>>, %arg22: memref<32x128xbf16, #tpu.memory_space<vmem>>, %arg23: memref<1x128xf32, #tpu.memory_space<vmem>>, %arg24: memref<2x8x128xf32, #tpu.memory_space<vmem>>, %arg25: memref<16x32xf32, #tpu.memory_space<vmem>>) attributes {dimension_semantics = [#tpu.dimension_semantics<parallel>, #tpu.dimension_semantics<arbitrary>], iteration_bounds = array<i64: 1, 1>, scalar_prefetch = 0 : i64, scratch_operands = 1 : i64, tpu.core_type = #tpu.core_type<tc>, window_params = [{transform_indices = @transform_0, window_bounds = array<i64: 2, 8, 32>}, {transform_indices = @transform_1, window_bounds = array<i64: 2, 1, 8>}, {pipeline_mode = #tpu.pipeline_mode<synchronous>, transform_indices = @transform_2, window_bounds = array<i64: 1, 32>}, {pipeline_mode = #tpu.pipeline_mode<synchronous>, transform_indices = @transform_3, window_bounds = array<i64: 1, 32>}, {transform_indices = @transform_4, window_bounds = array<i64: 1, 32, 96>}, {transform_indices = @transform_5, window_bounds = array<i64: 1, 1, 96>}, {transform_indices = @transform_6, window_bounds = array<i64: 1, 32, 32>}, {transform_indices = @transform_7, window_bounds = array<i64: 1, 1, 32>}, {transform_indices = @transform_8, window_bounds = array<i64: 1, 1, 32>}, {transform_indices = @transform_9, window_bounds = array<i64: 1, 1, 32>}, {transform_indices = @transform_10, window_bounds = array<i64: 1, 32, 64>}, {transform_indices = @transform_11, window_bounds = array<i64: 1, 1, 64>}, {transform_indices = @transform_12, window_bounds = array<i64: 1, 64, 32>}, {transform_indices = @transform_13, window_bounds = array<i64: 1, 1, 32>}, {transform_indices = @transform_14, window_bounds = array<i64: 1, 1, 32>}, {transform_indices = @transform_15, window_bounds = array<i64: 1, 1, 32>}, {pipeline_mode = #tpu.pipeline_mode<synchronous>, transform_indices = @transform_16, window_bounds = array<i64: 32, 32>}, {pipeline_mode = #tpu.pipeline_mode<synchronous>, transform_indices = @transform_17, window_bounds = array<i64: 1, 32>}, {pipeline_mode = #tpu.pipeline_mode<synchronous>, transform_indices = @transform_18, window_bounds = array<i64: 1, 32>}, {pipeline_mode = #tpu.pipeline_mode<synchronous>, transform_indices = @transform_19, window_bounds = array<i64: 1, 32>}, {pipeline_mode = #tpu.pipeline_mode<synchronous>, transform_indices = @transform_20, window_bounds = array<i64: 32, 128>}, {pipeline_mode = #tpu.pipeline_mode<synchronous>, transform_indices = @transform_21, window_bounds = array<i64: 1, 128>}, {transform_indices = @transform_22, window_bounds = array<i64: 2, 8, 128>}]} {
    %c0_i32 = arith.constant 0 : i32
    %0 = arith.cmpi eq, %arg1, %c0_i32 : i32
    %1 = arith.extui %0 : i1 to i32
    %c0_i32_0 = arith.constant 0 : i32
    %2 = arith.cmpi ne, %1, %c0_i32_0 : i32
    scf.if %2 {
      %c0_78 = arith.constant 0 : index
      %c0_79 = arith.constant 0 : index
      %c0_80 = arith.constant 0 : index
      %196 = vector.load %arg2[%c0_78, %c0_79, %c0_80] : memref<2x8x32xf32, #tpu.memory_space<vmem>>, vector<2x8x32xf32>
      %197 = vector.shape_cast %196 : vector<2x8x32xf32> to vector<16x32xf32>
      %c0_81 = arith.constant 0 : index
      %c0_82 = arith.constant 0 : index
      %198 = vector.load %arg4[%c0_81, %c0_82] : memref<1x32xf32, #tpu.memory_space<vmem>>, vector<1x32xf32>
      %c0_83 = arith.constant 0 : index
      %c0_84 = arith.constant 0 : index
      %199 = vector.load %arg5[%c0_83, %c0_84] : memref<1x32xf32, #tpu.memory_space<vmem>>, vector<1x32xf32>
      %cst_85 = arith.constant dense<0.000000e+00> : vector<16xf32>
      %200 = vector.multi_reduction <add>, %197, %cst_85 [1] : vector<16x32xf32> to vector<16xf32>
      %201 = vector.shape_cast %200 : vector<16xf32> to vector<16x1xf32>
      %cst_86 = arith.constant 3.200000e+01 : f32
      %202 = vector.broadcast %cst_86 : f32 to vector<16x1xf32>
      %203 = arith.divf %201, %202 : vector<16x1xf32>
      %204 = vector.broadcast %203 : vector<16x1xf32> to vector<16x32xf32>
      %205 = arith.subf %197, %204 : vector<16x32xf32>
      %206 = arith.mulf %205, %205 : vector<16x32xf32>
      %cst_87 = arith.constant dense<0.000000e+00> : vector<16xf32>
      %207 = vector.multi_reduction <add>, %206, %cst_87 [1] : vector<16x32xf32> to vector<16xf32>
      %208 = vector.shape_cast %207 : vector<16xf32> to vector<16x1xf32>
      %cst_88 = arith.constant 3.200000e+01 : f32
      %209 = vector.broadcast %cst_88 : f32 to vector<16x1xf32>
      %210 = arith.divf %208, %209 : vector<16x1xf32>
      %cst_89 = arith.constant 9.99999996E-13 : f32
      %211 = vector.broadcast %cst_89 : f32 to vector<16x1xf32>
      %212 = arith.addf %210, %211 : vector<16x1xf32>
      %213 = math.rsqrt %212 : vector<16x1xf32>
      %214 = vector.broadcast %213 : vector<16x1xf32> to vector<16x32xf32>
      %215 = arith.mulf %205, %214 : vector<16x32xf32>
      %216 = vector.broadcast %198 : vector<1x32xf32> to vector<16x32xf32>
      %217 = arith.mulf %215, %216 : vector<16x32xf32>
      %218 = vector.broadcast %199 : vector<1x32xf32> to vector<16x32xf32>
      %219 = arith.addf %217, %218 : vector<16x32xf32>
      %c0_90 = arith.constant 0 : index
      %c0_91 = arith.constant 0 : index
      %220 = vector.load %arg25[%c0_90, %c0_91] : memref<16x32xf32, #tpu.memory_space<vmem>>, vector<16x32xf32>
      tpu.vector_store %arg25[%c0_90, %c0_91], %219 {strides = array<i32>} : memref<16x32xf32, #tpu.memory_space<vmem>>, vector<16x32xf32>,
    } else {
    }
    %c0 = arith.constant 0 : index
    %c0_1 = arith.constant 0 : index
    %3 = vector.load %arg25[%c0, %c0_1] : memref<16x32xf32, #tpu.memory_space<vmem>>, vector<16x32xf32>
    %c0_2 = arith.constant 0 : index
    %c0_3 = arith.constant 0 : index
    %c0_4 = arith.constant 0 : index
    %4 = vector.load %arg3[%c0_2, %c0_3, %c0_4] : memref<2x1x8xf32, #tpu.memory_space<vmem>>, vector<2x1x8xf32>
    %c0_5 = arith.constant 0 : index
    %c0_6 = arith.constant 0 : index
    %c0_7 = arith.constant 0 : index
    %5 = vector.load %arg6[%c0_5, %c0_6, %c0_7] : memref<1x32x96xbf16, #tpu.memory_space<vmem>>, vector<1x32x96xbf16>
    %6 = vector.shape_cast %5 : vector<1x32x96xbf16> to vector<32x96xbf16>
    %7 = arith.truncf %3 : vector<16x32xf32> to vector<16x32xbf16>
    %cst = arith.constant dense<0.000000e+00> : vector<16x96xf32>
    %8 = tpu.matmul %7, %6, %cst {dimension_numbers = #tpu.dot_dimension_numbers<[1], [0], [0], [1], [0, 0, 1, 1], [], []>} : vector<16x32xbf16>, vector<32x96xbf16>, vector<16x96xf32> -> vector<16x96xf32>
    %c0_8 = arith.constant 0 : index
    %c0_9 = arith.constant 0 : index
    %c0_10 = arith.constant 0 : index
    %9 = vector.load %arg7[%c0_8, %c0_9, %c0_10] : memref<1x1x96xf32, #tpu.memory_space<vmem>>, vector<1x1x96xf32>
    %10 = vector.shape_cast %9 : vector<1x1x96xf32> to vector<1x96xf32>
    %11 = vector.broadcast %10 : vector<1x96xf32> to vector<16x96xf32>
    %12 = arith.addf %8, %11 : vector<16x96xf32>
    %13 = vector.extract_strided_slice %12 {offsets = [0, 0], sizes = [16, 32], strides = [1, 1]} : vector<16x96xf32> to vector<16x32xf32>
    %14 = vector.shape_cast %13 : vector<16x32xf32> to vector<2x8x32xf32>
    %15 = vector.extract_strided_slice %12 {offsets = [0, 32], sizes = [16, 32], strides = [1, 1]} : vector<16x96xf32> to vector<16x32xf32>
    %16 = vector.shape_cast %15 : vector<16x32xf32> to vector<2x8x32xf32>
    %17 = vector.extract_strided_slice %12 {offsets = [0, 64], sizes = [16, 32], strides = [1, 1]} : vector<16x96xf32> to vector<16x32xf32>
    %18 = vector.shape_cast %17 : vector<16x32xf32> to vector<2x8x32xf32>
    %19 = vector.extract_strided_slice %14 {offsets = [0, 0, 0], sizes = [2, 8, 8], strides = [1, 1, 1]} : vector<2x8x32xf32> to vector<2x8x8xf32>
    %20 = vector.extract_strided_slice %16 {offsets = [0, 0, 0], sizes = [2, 8, 8], strides = [1, 1, 1]} : vector<2x8x32xf32> to vector<2x8x8xf32>
    %21 = arith.truncf %19 : vector<2x8x8xf32> to vector<2x8x8xbf16>
    %22 = arith.truncf %20 : vector<2x8x8xf32> to vector<2x8x8xbf16>
    "tpu.trace_start"() <{level = 10 : i32, message = "bqd,bkd->bqk"}> : () -> ()
    %cst_11 = arith.constant dense<0.000000e+00> : vector<2x8x8xf32>
    %23 = tpu.matmul %21, %22, %cst_11 {dimension_numbers = #tpu.dot_dimension_numbers<[2], [2], [1], [1], [0, 0, 0, 1, 1, 1], [0], [0]>} : vector<2x8x8xbf16>, vector<2x8x8xbf16>, vector<2x8x8xf32> -> vector<2x8x8xf32>
    "tpu.trace_stop"() : () -> ()
    %24 = vector.broadcast %4 : vector<2x1x8xf32> to vector<2x8x8xf32>
    %25 = arith.addf %23, %24 : vector<2x8x8xf32>
    %cst_12 = arith.constant dense<0xFF800000> : vector<2x8xf32>
    %26 = vector.multi_reduction <maximumf>, %25, %cst_12 [2] : vector<2x8x8xf32> to vector<2x8xf32>
    %27 = vector.shape_cast %26 : vector<2x8xf32> to vector<2x8x1xf32>
    %28 = vector.broadcast %27 : vector<2x8x1xf32> to vector<2x8x8xf32>
    %29 = arith.subf %25, %28 : vector<2x8x8xf32>
    %30 = math.exp %29 : vector<2x8x8xf32>
    %cst_13 = arith.constant dense<0.000000e+00> : vector<2x8xf32>
    %31 = vector.multi_reduction <add>, %30, %cst_13 [2] : vector<2x8x8xf32> to vector<2x8xf32>
    %32 = vector.shape_cast %31 : vector<2x8xf32> to vector<2x8x1xf32>
    %33 = tpu.reciprocal %32 {approx = true} : vector<2x8x1xf32> -> vector<2x8x1xf32>
    %34 = vector.broadcast %33 : vector<2x8x1xf32> to vector<2x8x8xf32>
    %35 = arith.mulf %30, %34 : vector<2x8x8xf32>
    %36 = vector.extract_strided_slice %18 {offsets = [0, 0, 0], sizes = [2, 8, 8], strides = [1, 1, 1]} : vector<2x8x32xf32> to vector<2x8x8xf32>
    %37 = arith.truncf %35 : vector<2x8x8xf32> to vector<2x8x8xbf16>
    %38 = arith.truncf %36 : vector<2x8x8xf32> to vector<2x8x8xbf16>
    "tpu.trace_start"() <{level = 10 : i32, message = "bqk,bkd->bqd"}> : () -> ()
    %cst_14 = arith.constant dense<0.000000e+00> : vector<2x8x8xf32>
    %39 = tpu.matmul %37, %38, %cst_14 {dimension_numbers = #tpu.dot_dimension_numbers<[2], [1], [1], [2], [0, 0, 0, 1, 1, 2], [0], [0]>} : vector<2x8x8xbf16>, vector<2x8x8xbf16>, vector<2x8x8xf32> -> vector<2x8x8xf32>
    "tpu.trace_stop"() : () -> ()
    %40 = vector.extract_strided_slice %14 {offsets = [0, 0, 8], sizes = [2, 8, 8], strides = [1, 1, 1]} : vector<2x8x32xf32> to vector<2x8x8xf32>
    %41 = vector.extract_strided_slice %16 {offsets = [0, 0, 8], sizes = [2, 8, 8], strides = [1, 1, 1]} : vector<2x8x32xf32> to vector<2x8x8xf32>
    %42 = arith.truncf %40 : vector<2x8x8xf32> to vector<2x8x8xbf16>
    %43 = arith.truncf %41 : vector<2x8x8xf32> to vector<2x8x8xbf16>
    "tpu.trace_start"() <{level = 10 : i32, message = "bqd,bkd->bqk"}> : () -> ()
    %cst_15 = arith.constant dense<0.000000e+00> : vector<2x8x8xf32>
    %44 = tpu.matmul %42, %43, %cst_15 {dimension_numbers = #tpu.dot_dimension_numbers<[2], [2], [1], [1], [0, 0, 0, 1, 1, 1], [0], [0]>} : vector<2x8x8xbf16>, vector<2x8x8xbf16>, vector<2x8x8xf32> -> vector<2x8x8xf32>
    "tpu.trace_stop"() : () -> ()
    %45 = vector.broadcast %4 : vector<2x1x8xf32> to vector<2x8x8xf32>
    %46 = arith.addf %44, %45 : vector<2x8x8xf32>
    %cst_16 = arith.constant dense<0xFF800000> : vector<2x8xf32>
    %47 = vector.multi_reduction <maximumf>, %46, %cst_16 [2] : vector<2x8x8xf32> to vector<2x8xf32>
    %48 = vector.shape_cast %47 : vector<2x8xf32> to vector<2x8x1xf32>
    %49 = vector.broadcast %48 : vector<2x8x1xf32> to vector<2x8x8xf32>
    %50 = arith.subf %46, %49 : vector<2x8x8xf32>
    %51 = math.exp %50 : vector<2x8x8xf32>
    %cst_17 = arith.constant dense<0.000000e+00> : vector<2x8xf32>
    %52 = vector.multi_reduction <add>, %51, %cst_17 [2] : vector<2x8x8xf32> to vector<2x8xf32>
    %53 = vector.shape_cast %52 : vector<2x8xf32> to vector<2x8x1xf32>
    %54 = tpu.reciprocal %53 {approx = true} : vector<2x8x1xf32> -> vector<2x8x1xf32>
    %55 = vector.broadcast %54 : vector<2x8x1xf32> to vector<2x8x8xf32>
    %56 = arith.mulf %51, %55 : vector<2x8x8xf32>
    %57 = vector.extract_strided_slice %18 {offsets = [0, 0, 8], sizes = [2, 8, 8], strides = [1, 1, 1]} : vector<2x8x32xf32> to vector<2x8x8xf32>
    %58 = arith.truncf %56 : vector<2x8x8xf32> to vector<2x8x8xbf16>
    %59 = arith.truncf %57 : vector<2x8x8xf32> to vector<2x8x8xbf16>
    "tpu.trace_start"() <{level = 10 : i32, message = "bqk,bkd->bqd"}> : () -> ()
    %cst_18 = arith.constant dense<0.000000e+00> : vector<2x8x8xf32>
    %60 = tpu.matmul %58, %59, %cst_18 {dimension_numbers = #tpu.dot_dimension_numbers<[2], [1], [1], [2], [0, 0, 0, 1, 1, 2], [0], [0]>} : vector<2x8x8xbf16>, vector<2x8x8xbf16>, vector<2x8x8xf32> -> vector<2x8x8xf32>
    "tpu.trace_stop"() : () -> ()
    %61 = vector.extract_strided_slice %14 {offsets = [0, 0, 16], sizes = [2, 8, 8], strides = [1, 1, 1]} : vector<2x8x32xf32> to vector<2x8x8xf32>
    %62 = vector.extract_strided_slice %16 {offsets = [0, 0, 16], sizes = [2, 8, 8], strides = [1, 1, 1]} : vector<2x8x32xf32> to vector<2x8x8xf32>
    %63 = arith.truncf %61 : vector<2x8x8xf32> to vector<2x8x8xbf16>
    %64 = arith.truncf %62 : vector<2x8x8xf32> to vector<2x8x8xbf16>
    "tpu.trace_start"() <{level = 10 : i32, message = "bqd,bkd->bqk"}> : () -> ()
    %cst_19 = arith.constant dense<0.000000e+00> : vector<2x8x8xf32>
    %65 = tpu.matmul %63, %64, %cst_19 {dimension_numbers = #tpu.dot_dimension_numbers<[2], [2], [1], [1], [0, 0, 0, 1, 1, 1], [0], [0]>} : vector<2x8x8xbf16>, vector<2x8x8xbf16>, vector<2x8x8xf32> -> vector<2x8x8xf32>
    "tpu.trace_stop"() : () -> ()
    %66 = vector.broadcast %4 : vector<2x1x8xf32> to vector<2x8x8xf32>
    %67 = arith.addf %65, %66 : vector<2x8x8xf32>
    %cst_20 = arith.constant dense<0xFF800000> : vector<2x8xf32>
    %68 = vector.multi_reduction <maximumf>, %67, %cst_20 [2] : vector<2x8x8xf32> to vector<2x8xf32>
    %69 = vector.shape_cast %68 : vector<2x8xf32> to vector<2x8x1xf32>
    %70 = vector.broadcast %69 : vector<2x8x1xf32> to vector<2x8x8xf32>
    %71 = arith.subf %67, %70 : vector<2x8x8xf32>
    %72 = math.exp %71 : vector<2x8x8xf32>
    %cst_21 = arith.constant dense<0.000000e+00> : vector<2x8xf32>
    %73 = vector.multi_reduction <add>, %72, %cst_21 [2] : vector<2x8x8xf32> to vector<2x8xf32>
    %74 = vector.shape_cast %73 : vector<2x8xf32> to vector<2x8x1xf32>
    %75 = tpu.reciprocal %74 {approx = true} : vector<2x8x1xf32> -> vector<2x8x1xf32>
    %76 = vector.broadcast %75 : vector<2x8x1xf32> to vector<2x8x8xf32>
    %77 = arith.mulf %72, %76 : vector<2x8x8xf32>
    %78 = vector.extract_strided_slice %18 {offsets = [0, 0, 16], sizes = [2, 8, 8], strides = [1, 1, 1]} : vector<2x8x32xf32> to vector<2x8x8xf32>
    %79 = arith.truncf %77 : vector<2x8x8xf32> to vector<2x8x8xbf16>
    %80 = arith.truncf %78 : vector<2x8x8xf32> to vector<2x8x8xbf16>
    "tpu.trace_start"() <{level = 10 : i32, message = "bqk,bkd->bqd"}> : () -> ()
    %cst_22 = arith.constant dense<0.000000e+00> : vector<2x8x8xf32>
    %81 = tpu.matmul %79, %80, %cst_22 {dimension_numbers = #tpu.dot_dimension_numbers<[2], [1], [1], [2], [0, 0, 0, 1, 1, 2], [0], [0]>} : vector<2x8x8xbf16>, vector<2x8x8xbf16>, vector<2x8x8xf32> -> vector<2x8x8xf32>
    "tpu.trace_stop"() : () -> ()
    %82 = vector.extract_strided_slice %14 {offsets = [0, 0, 24], sizes = [2, 8, 8], strides = [1, 1, 1]} : vector<2x8x32xf32> to vector<2x8x8xf32>
    %83 = vector.extract_strided_slice %16 {offsets = [0, 0, 24], sizes = [2, 8, 8], strides = [1, 1, 1]} : vector<2x8x32xf32> to vector<2x8x8xf32>
    %84 = arith.truncf %82 : vector<2x8x8xf32> to vector<2x8x8xbf16>
    %85 = arith.truncf %83 : vector<2x8x8xf32> to vector<2x8x8xbf16>
    "tpu.trace_start"() <{level = 10 : i32, message = "bqd,bkd->bqk"}> : () -> ()
    %cst_23 = arith.constant dense<0.000000e+00> : vector<2x8x8xf32>
    %86 = tpu.matmul %84, %85, %cst_23 {dimension_numbers = #tpu.dot_dimension_numbers<[2], [2], [1], [1], [0, 0, 0, 1, 1, 1], [0], [0]>} : vector<2x8x8xbf16>, vector<2x8x8xbf16>, vector<2x8x8xf32> -> vector<2x8x8xf32>
    "tpu.trace_stop"() : () -> ()
    %87 = vector.broadcast %4 : vector<2x1x8xf32> to vector<2x8x8xf32>
    %88 = arith.addf %86, %87 : vector<2x8x8xf32>
    %cst_24 = arith.constant dense<0xFF800000> : vector<2x8xf32>
    %89 = vector.multi_reduction <maximumf>, %88, %cst_24 [2] : vector<2x8x8xf32> to vector<2x8xf32>
    %90 = vector.shape_cast %89 : vector<2x8xf32> to vector<2x8x1xf32>
    %91 = vector.broadcast %90 : vector<2x8x1xf32> to vector<2x8x8xf32>
    %92 = arith.subf %88, %91 : vector<2x8x8xf32>
    %93 = math.exp %92 : vector<2x8x8xf32>
    %cst_25 = arith.constant dense<0.000000e+00> : vector<2x8xf32>
    %94 = vector.multi_reduction <add>, %93, %cst_25 [2] : vector<2x8x8xf32> to vector<2x8xf32>
    %95 = vector.shape_cast %94 : vector<2x8xf32> to vector<2x8x1xf32>
    %96 = tpu.reciprocal %95 {approx = true} : vector<2x8x1xf32> -> vector<2x8x1xf32>
    %97 = vector.broadcast %96 : vector<2x8x1xf32> to vector<2x8x8xf32>
    %98 = arith.mulf %93, %97 : vector<2x8x8xf32>
    %99 = vector.extract_strided_slice %18 {offsets = [0, 0, 24], sizes = [2, 8, 8], strides = [1, 1, 1]} : vector<2x8x32xf32> to vector<2x8x8xf32>
    %100 = arith.truncf %98 : vector<2x8x8xf32> to vector<2x8x8xbf16>
    %101 = arith.truncf %99 : vector<2x8x8xf32> to vector<2x8x8xbf16>
    "tpu.trace_start"() <{level = 10 : i32, message = "bqk,bkd->bqd"}> : () -> ()
    %cst_26 = arith.constant dense<0.000000e+00> : vector<2x8x8xf32>
    %102 = tpu.matmul %100, %101, %cst_26 {dimension_numbers = #tpu.dot_dimension_numbers<[2], [1], [1], [2], [0, 0, 0, 1, 1, 2], [0], [0]>} : vector<2x8x8xbf16>, vector<2x8x8xbf16>, vector<2x8x8xf32> -> vector<2x8x8xf32>
    "tpu.trace_stop"() : () -> ()
    %103 = tpu.concatenate %39, %60, %81, %102 in 2 : vector<2x8x8xf32>, vector<2x8x8xf32>, vector<2x8x8xf32>, vector<2x8x8xf32> -> vector<2x8x32xf32>
    %104 = vector.shape_cast %103 : vector<2x8x32xf32> to vector<16x32xf32>
    %c0_27 = arith.constant 0 : index
    %c0_28 = arith.constant 0 : index
    %c0_29 = arith.constant 0 : index
    %105 = vector.load %arg8[%c0_27, %c0_28, %c0_29] : memref<1x32x32xbf16, #tpu.memory_space<vmem>>, vector<1x32x32xbf16>
    %106 = vector.shape_cast %105 : vector<1x32x32xbf16> to vector<32x32xbf16>
    %107 = arith.truncf %104 : vector<16x32xf32> to vector<16x32xbf16>
    %cst_30 = arith.constant dense<0.000000e+00> : vector<16x32xf32>
    %108 = tpu.matmul %107, %106, %cst_30 {dimension_numbers = #tpu.dot_dimension_numbers<[1], [0], [0], [1], [0, 0, 1, 1], [], []>} : vector<16x32xbf16>, vector<32x32xbf16>, vector<16x32xf32> -> vector<16x32xf32>
    %c0_31 = arith.constant 0 : index
    %c0_32 = arith.constant 0 : index
    %c0_33 = arith.constant 0 : index
    %109 = vector.load %arg9[%c0_31, %c0_32, %c0_33] : memref<1x1x32xf32, #tpu.memory_space<vmem>>, vector<1x1x32xf32>
    %110 = vector.shape_cast %109 : vector<1x1x32xf32> to vector<1x32xf32>
    %111 = vector.broadcast %110 : vector<1x32xf32> to vector<16x32xf32>
    %112 = arith.addf %108, %111 : vector<16x32xf32>
    %113 = arith.addf %112, %3 : vector<16x32xf32>
    %c0_34 = arith.constant 0 : index
    %c0_35 = arith.constant 0 : index
    %c0_36 = arith.constant 0 : index
    %114 = vector.load %arg10[%c0_34, %c0_35, %c0_36] : memref<1x1x32xf32, #tpu.memory_space<vmem>>, vector<1x1x32xf32>
    %115 = vector.shape_cast %114 : vector<1x1x32xf32> to vector<1x32xf32>
    %c0_37 = arith.constant 0 : index
    %c0_38 = arith.constant 0 : index
    %c0_39 = arith.constant 0 : index
    %116 = vector.load %arg11[%c0_37, %c0_38, %c0_39] : memref<1x1x32xf32, #tpu.memory_space<vmem>>, vector<1x1x32xf32>
    %117 = vector.shape_cast %116 : vector<1x1x32xf32> to vector<1x32xf32>
    %cst_40 = arith.constant dense<0.000000e+00> : vector<16xf32>
    %118 = vector.multi_reduction <add>, %113, %cst_40 [1] : vector<16x32xf32> to vector<16xf32>
    %119 = vector.shape_cast %118 : vector<16xf32> to vector<16x1xf32>
    %cst_41 = arith.constant 3.200000e+01 : f32
    %120 = vector.broadcast %cst_41 : f32 to vector<16x1xf32>
    %121 = arith.divf %119, %120 : vector<16x1xf32>
    %122 = vector.broadcast %121 : vector<16x1xf32> to vector<16x32xf32>
    %123 = arith.subf %113, %122 : vector<16x32xf32>
    %124 = arith.mulf %123, %123 : vector<16x32xf32>
    %cst_42 = arith.constant dense<0.000000e+00> : vector<16xf32>
    %125 = vector.multi_reduction <add>, %124, %cst_42 [1] : vector<16x32xf32> to vector<16xf32>
    %126 = vector.shape_cast %125 : vector<16xf32> to vector<16x1xf32>
    %cst_43 = arith.constant 3.200000e+01 : f32
    %127 = vector.broadcast %cst_43 : f32 to vector<16x1xf32>
    %128 = arith.divf %126, %127 : vector<16x1xf32>
    %cst_44 = arith.constant 9.99999996E-13 : f32
    %129 = vector.broadcast %cst_44 : f32 to vector<16x1xf32>
    %130 = arith.addf %128, %129 : vector<16x1xf32>
    %131 = math.rsqrt %130 : vector<16x1xf32>
    %132 = vector.broadcast %131 : vector<16x1xf32> to vector<16x32xf32>
    %133 = arith.mulf %123, %132 : vector<16x32xf32>
    %134 = vector.broadcast %115 : vector<1x32xf32> to vector<16x32xf32>
    %135 = arith.mulf %133, %134 : vector<16x32xf32>
    %136 = vector.broadcast %117 : vector<1x32xf32> to vector<16x32xf32>
    %137 = arith.addf %135, %136 : vector<16x32xf32>
    %c0_45 = arith.constant 0 : index
    %c0_46 = arith.constant 0 : index
    %c0_47 = arith.constant 0 : index
    %138 = vector.load %arg12[%c0_45, %c0_46, %c0_47] : memref<1x32x64xbf16, #tpu.memory_space<vmem>>, vector<1x32x64xbf16>
    %139 = vector.shape_cast %138 : vector<1x32x64xbf16> to vector<32x64xbf16>
    %140 = arith.truncf %137 : vector<16x32xf32> to vector<16x32xbf16>
    %cst_48 = arith.constant dense<0.000000e+00> : vector<16x64xf32>
    %141 = tpu.matmul %140, %139, %cst_48 {dimension_numbers = #tpu.dot_dimension_numbers<[1], [0], [0], [1], [0, 0, 1, 1], [], []>} : vector<16x32xbf16>, vector<32x64xbf16>, vector<16x64xf32> -> vector<16x64xf32>
    %c0_49 = arith.constant 0 : index
    %c0_50 = arith.constant 0 : index
    %c0_51 = arith.constant 0 : index
    %142 = vector.load %arg13[%c0_49, %c0_50, %c0_51] : memref<1x1x64xf32, #tpu.memory_space<vmem>>, vector<1x1x64xf32>
    %143 = vector.shape_cast %142 : vector<1x1x64xf32> to vector<1x64xf32>
    %144 = vector.broadcast %143 : vector<1x64xf32> to vector<16x64xf32>
    %145 = arith.addf %141, %144 : vector<16x64xf32>
    %cst_52 = arith.constant 5.000000e-01 : f32
    %146 = vector.broadcast %cst_52 : f32 to vector<16x64xf32>
    %147 = arith.mulf %146, %145 : vector<16x64xf32>
    %cst_53 = arith.constant 4.471500e-02 : f32
    %148 = vector.broadcast %cst_53 : f32 to vector<16x64xf32>
    %149 = arith.mulf %148, %145 : vector<16x64xf32>
    %150 = arith.mulf %149, %145 : vector<16x64xf32>
    %151 = arith.mulf %150, %145 : vector<16x64xf32>
    %152 = arith.addf %145, %151 : vector<16x64xf32>
    %cst_54 = arith.constant 0.797884583 : f32
    %153 = vector.broadcast %cst_54 : f32 to vector<16x64xf32>
    %154 = arith.mulf %153, %152 : vector<16x64xf32>
    %155 = math.tanh %154 : vector<16x64xf32>
    %cst_55 = arith.constant 1.000000e+00 : f32
    %156 = vector.broadcast %cst_55 : f32 to vector<16x64xf32>
    %157 = arith.addf %156, %155 : vector<16x64xf32>
    %158 = arith.mulf %147, %157 : vector<16x64xf32>
    %c0_56 = arith.constant 0 : index
    %c0_57 = arith.constant 0 : index
    %c0_58 = arith.constant 0 : index
    %159 = vector.load %arg14[%c0_56, %c0_57, %c0_58] : memref<1x64x32xbf16, #tpu.memory_space<vmem>>, vector<1x64x32xbf16>
    %160 = vector.shape_cast %159 : vector<1x64x32xbf16> to vector<64x32xbf16>
    %161 = arith.truncf %158 : vector<16x64xf32> to vector<16x64xbf16>
    %cst_59 = arith.constant dense<0.000000e+00> : vector<16x32xf32>
    %162 = tpu.matmul %161, %160, %cst_59 {dimension_numbers = #tpu.dot_dimension_numbers<[1], [0], [0], [1], [0, 0, 1, 1], [], []>} : vector<16x64xbf16>, vector<64x32xbf16>, vector<16x32xf32> -> vector<16x32xf32>
    %c0_60 = arith.constant 0 : index
    %c0_61 = arith.constant 0 : index
    %c0_62 = arith.constant 0 : index
    %163 = vector.load %arg15[%c0_60, %c0_61, %c0_62] : memref<1x1x32xf32, #tpu.memory_space<vmem>>, vector<1x1x32xf32>
    %164 = vector.shape_cast %163 : vector<1x1x32xf32> to vector<1x32xf32>
    %165 = vector.broadcast %164 : vector<1x32xf32> to vector<16x32xf32>
    %166 = arith.addf %162, %165 : vector<16x32xf32>
    %167 = arith.addf %166, %137 : vector<16x32xf32>
    %c0_63 = arith.constant 0 : index
    %c0_64 = arith.constant 0 : index
    %c0_65 = arith.constant 0 : index
    %168 = vector.load %arg16[%c0_63, %c0_64, %c0_65] : memref<1x1x32xf32, #tpu.memory_space<vmem>>, vector<1x1x32xf32>
    %169 = vector.shape_cast %168 : vector<1x1x32xf32> to vector<1x32xf32>
    %c0_66 = arith.constant 0 : index
    %c0_67 = arith.constant 0 : index
    %c0_68 = arith.constant 0 : index
    %170 = vector.load %arg17[%c0_66, %c0_67, %c0_68] : memref<1x1x32xf32, #tpu.memory_space<vmem>>, vector<1x1x32xf32>
    %171 = vector.shape_cast %170 : vector<1x1x32xf32> to vector<1x32xf32>
    %cst_69 = arith.constant dense<0.000000e+00> : vector<16xf32>
    %172 = vector.multi_reduction <add>, %167, %cst_69 [1] : vector<16x32xf32> to vector<16xf32>
    %173 = vector.shape_cast %172 : vector<16xf32> to vector<16x1xf32>
    %cst_70 = arith.constant 3.200000e+01 : f32
    %174 = vector.broadcast %cst_70 : f32 to vector<16x1xf32>
    %175 = arith.divf %173, %174 : vector<16x1xf32>
    %176 = vector.broadcast %175 : vector<16x1xf32> to vector<16x32xf32>
    %177 = arith.subf %167, %176 : vector<16x32xf32>
    %178 = arith.mulf %177, %177 : vector<16x32xf32>
    %cst_71 = arith.constant dense<0.000000e+00> : vector<16xf32>
    %179 = vector.multi_reduction <add>, %178, %cst_71 [1] : vector<16x32xf32> to vector<16xf32>
    %180 = vector.shape_cast %179 : vector<16xf32> to vector<16x1xf32>
    %cst_72 = arith.constant 3.200000e+01 : f32
    %181 = vector.broadcast %cst_72 : f32 to vector<16x1xf32>
    %182 = arith.divf %180, %181 : vector<16x1xf32>
    %cst_73 = arith.constant 9.99999996E-13 : f32
    %183 = vector.broadcast %cst_73 : f32 to vector<16x1xf32>
    %184 = arith.addf %182, %183 : vector<16x1xf32>
    %185 = math.rsqrt %184 : vector<16x1xf32>
    %186 = vector.broadcast %185 : vector<16x1xf32> to vector<16x32xf32>
    %187 = arith.mulf %177, %186 : vector<16x32xf32>
    %188 = vector.broadcast %169 : vector<1x32xf32> to vector<16x32xf32>
    %189 = arith.mulf %187, %188 : vector<16x32xf32>
    %190 = vector.broadcast %171 : vector<1x32xf32> to vector<16x32xf32>
    %191 = arith.addf %189, %190 : vector<16x32xf32>
    %c0_74 = arith.constant 0 : index
    %c0_75 = arith.constant 0 : index
    %192 = vector.load %arg25[%c0_74, %c0_75] : memref<16x32xf32, #tpu.memory_space<vmem>>, vector<16x32xf32>
    tpu.vector_store %arg25[%c0_74, %c0_75], %191 {strides = array<i32>} : memref<16x32xf32, #tpu.memory_space<vmem>>, vector<16x32xf32>,
    %c0_i32_76 = arith.constant 0 : i32
    %193 = arith.cmpi eq, %arg1, %c0_i32_76 : i32
    %194 = arith.extui %193 : i1 to i32
    %c0_i32_77 = arith.constant 0 : i32
    %195 = arith.cmpi ne, %194, %c0_i32_77 : i32
    scf.if %195 {
      %c0_78 = arith.constant 0 : index
      %c0_79 = arith.constant 0 : index
      %196 = vector.load %arg18[%c0_78, %c0_79] : memref<32x32xbf16, #tpu.memory_space<vmem>>, vector<32x32xbf16>
      %197 = arith.truncf %191 : vector<16x32xf32> to vector<16x32xbf16>
      %cst_80 = arith.constant dense<0.000000e+00> : vector<16x32xf32>
      %198 = tpu.matmul %197, %196, %cst_80 {dimension_numbers = #tpu.dot_dimension_numbers<[1], [0], [0], [1], [0, 0, 1, 1], [], []>} : vector<16x32xbf16>, vector<32x32xbf16>, vector<16x32xf32> -> vector<16x32xf32>
      %c0_81 = arith.constant 0 : index
      %c0_82 = arith.constant 0 : index
      %199 = vector.load %arg19[%c0_81, %c0_82] : memref<1x32xf32, #tpu.memory_space<vmem>>, vector<1x32xf32>
      %200 = vector.broadcast %199 : vector<1x32xf32> to vector<16x32xf32>
      %201 = arith.addf %198, %200 : vector<16x32xf32>
      %cst_83 = arith.constant 5.000000e-01 : f32
      %202 = vector.broadcast %cst_83 : f32 to vector<16x32xf32>
      %203 = arith.mulf %202, %201 : vector<16x32xf32>
      %cst_84 = arith.constant 4.471500e-02 : f32
      %204 = vector.broadcast %cst_84 : f32 to vector<16x32xf32>
      %205 = arith.mulf %204, %201 : vector<16x32xf32>
      %206 = arith.mulf %205, %201 : vector<16x32xf32>
      %207 = arith.mulf %206, %201 : vector<16x32xf32>
      %208 = arith.addf %201, %207 : vector<16x32xf32>
      %cst_85 = arith.constant 0.797884583 : f32
      %209 = vector.broadcast %cst_85 : f32 to vector<16x32xf32>
      %210 = arith.mulf %209, %208 : vector<16x32xf32>
      %211 = math.tanh %210 : vector<16x32xf32>
      %cst_86 = arith.constant 1.000000e+00 : f32
      %212 = vector.broadcast %cst_86 : f32 to vector<16x32xf32>
      %213 = arith.addf %212, %211 : vector<16x32xf32>
      %214 = arith.mulf %203, %213 : vector<16x32xf32>
      %c0_87 = arith.constant 0 : index
      %c0_88 = arith.constant 0 : index
      %215 = vector.load %arg20[%c0_87, %c0_88] : memref<1x32xf32, #tpu.memory_space<vmem>>, vector<1x32xf32>
      %c0_89 = arith.constant 0 : index
      %c0_90 = arith.constant 0 : index
      %216 = vector.load %arg21[%c0_89, %c0_90] : memref<1x32xf32, #tpu.memory_space<vmem>>, vector<1x32xf32>
      %cst_91 = arith.constant dense<0.000000e+00> : vector<16xf32>
      %217 = vector.multi_reduction <add>, %214, %cst_91 [1] : vector<16x32xf32> to vector<16xf32>
      %218 = vector.shape_cast %217 : vector<16xf32> to vector<16x1xf32>
      %cst_92 = arith.constant 3.200000e+01 : f32
      %219 = vector.broadcast %cst_92 : f32 to vector<16x1xf32>
      %220 = arith.divf %218, %219 : vector<16x1xf32>
      %221 = vector.broadcast %220 : vector<16x1xf32> to vector<16x32xf32>
      %222 = arith.subf %214, %221 : vector<16x32xf32>
      %223 = arith.mulf %222, %222 : vector<16x32xf32>
      %cst_93 = arith.constant dense<0.000000e+00> : vector<16xf32>
      %224 = vector.multi_reduction <add>, %223, %cst_93 [1] : vector<16x32xf32> to vector<16xf32>
      %225 = vector.shape_cast %224 : vector<16xf32> to vector<16x1xf32>
      %cst_94 = arith.constant 3.200000e+01 : f32
      %226 = vector.broadcast %cst_94 : f32 to vector<16x1xf32>
      %227 = arith.divf %225, %226 : vector<16x1xf32>
      %cst_95 = arith.constant 9.99999996E-13 : f32
      %228 = vector.broadcast %cst_95 : f32 to vector<16x1xf32>
      %229 = arith.addf %227, %228 : vector<16x1xf32>
      %230 = math.rsqrt %229 : vector<16x1xf32>
      %231 = vector.broadcast %230 : vector<16x1xf32> to vector<16x32xf32>
      %232 = arith.mulf %222, %231 : vector<16x32xf32>
      %233 = vector.broadcast %215 : vector<1x32xf32> to vector<16x32xf32>
      %234 = arith.mulf %232, %233 : vector<16x32xf32>
      %235 = vector.broadcast %216 : vector<1x32xf32> to vector<16x32xf32>
      %236 = arith.addf %234, %235 : vector<16x32xf32>
      %c0_96 = arith.constant 0 : index
      %c0_97 = arith.constant 0 : index
      %237 = vector.load %arg22[%c0_96, %c0_97] : memref<32x128xbf16, #tpu.memory_space<vmem>>, vector<32x128xbf16>
      %238 = arith.truncf %236 : vector<16x32xf32> to vector<16x32xbf16>
      %cst_98 = arith.constant dense<0.000000e+00> : vector<16x128xf32>
      %239 = tpu.matmul %238, %237, %cst_98 {dimension_numbers = #tpu.dot_dimension_numbers<[1], [0], [0], [1], [0, 0, 1, 1], [], []>} : vector<16x32xbf16>, vector<32x128xbf16>, vector<16x128xf32> -> vector<16x128xf32>
      %c0_99 = arith.constant 0 : index
      %c0_100 = arith.constant 0 : index
      %240 = vector.load %arg23[%c0_99, %c0_100] : memref<1x128xf32, #tpu.memory_space<vmem>>, vector<1x128xf32>
      %241 = vector.broadcast %240 : vector<1x128xf32> to vector<16x128xf32>
      %242 = arith.addf %239, %241 : vector<16x128xf32>
      %243 = vector.shape_cast %242 : vector<16x128xf32> to vector<2x8x128xf32>
      %c0_101 = arith.constant 0 : index
      %c0_102 = arith.constant 0 : index
      %c0_103 = arith.constant 0 : index
      %244 = vector.load %arg24[%c0_101, %c0_102, %c0_103] : memref<2x8x128xf32, #tpu.memory_space<vmem>>, vector<2x8x128xf32>
      tpu.vector_store %arg24[%c0_101, %c0_102, %c0_103], %243 {strides = array<i32>} : memref<2x8x128xf32, #tpu.memory_space<vmem>>, vector<2x8x128xf32>,
    } else {
    }
    return
  }
  func.func @transform_0(%arg0: i32, %arg1: i32) -> (i32, i32, i32) {
    %c0_i32 = arith.constant 0 : i32
    %c0_i32_0 = arith.constant 0 : i32
    %c0_i32_1 = arith.constant 0 : i32
    return %arg0, %c0_i32, %c0_i32_0 : i32, i32, i32
  }
  func.func @transform_1(%arg0: i32, %arg1: i32) -> (i32, i32, i32) {
    %c0_i32 = arith.constant 0 : i32
    %c0_i32_0 = arith.constant 0 : i32
    %c0_i32_1 = arith.constant 0 : i32
    return %arg0, %c0_i32, %c0_i32_0 : i32, i32, i32
  }
  func.func @transform_2(%arg0: i32, %arg1: i32) -> (i32, i32) {
    %c0_i32 = arith.constant 0 : i32
    %c0_i32_0 = arith.constant 0 : i32
    %c0_i32_1 = arith.constant 0 : i32
    return %c0_i32, %c0_i32_0 : i32, i32
  }
  func.func @transform_3(%arg0: i32, %arg1: i32) -> (i32, i32) {
    %c0_i32 = arith.constant 0 : i32
    %c0_i32_0 = arith.constant 0 : i32
    %c0_i32_1 = arith.constant 0 : i32
    return %c0_i32, %c0_i32_0 : i32, i32
  }
  func.func @transform_4(%arg0: i32, %arg1: i32) -> (i32, i32, i32) {
    %c0_i32 = arith.constant 0 : i32
    %c0_i32_0 = arith.constant 0 : i32
    %c0_i32_1 = arith.constant 0 : i32
    return %arg1, %c0_i32, %c0_i32_0 : i32, i32, i32
  }
  func.func @transform_5(%arg0: i32, %arg1: i32) -> (i32, i32, i32) {
    %c0_i32 = arith.constant 0 : i32
    %c0_i32_0 = arith.constant 0 : i32
    %c0_i32_1 = arith.constant 0 : i32
    return %arg1, %c0_i32, %c0_i32_0 : i32, i32, i32
  }
  func.func @transform_6(%arg0: i32, %arg1: i32) -> (i32, i32, i32) {
    %c0_i32 = arith.constant 0 : i32
    %c0_i32_0 = arith.constant 0 : i32
    %c0_i32_1 = arith.constant 0 : i32
    return %arg1, %c0_i32, %c0_i32_0 : i32, i32, i32
  }
  func.func @transform_7(%arg0: i32, %arg1: i32) -> (i32, i32, i32) {
    %c0_i32 = arith.constant 0 : i32
    %c0_i32_0 = arith.constant 0 : i32
    %c0_i32_1 = arith.constant 0 : i32
    return %arg1, %c0_i32, %c0_i32_0 : i32, i32, i32
  }
  func.func @transform_8(%arg0: i32, %arg1: i32) -> (i32, i32, i32) {
    %c0_i32 = arith.constant 0 : i32
    %c0_i32_0 = arith.constant 0 : i32
    %c0_i32_1 = arith.constant 0 : i32
    return %arg1, %c0_i32, %c0_i32_0 : i32, i32, i32
  }
  func.func @transform_9(%arg0: i32, %arg1: i32) -> (i32, i32, i32) {
    %c0_i32 = arith.constant 0 : i32
    %c0_i32_0 = arith.constant 0 : i32
    %c0_i32_1 = arith.constant 0 : i32
    return %arg1, %c0_i32, %c0_i32_0 : i32, i32, i32
  }
  func.func @transform_10(%arg0: i32, %arg1: i32) -> (i32, i32, i32) {
    %c0_i32 = arith.constant 0 : i32
    %c0_i32_0 = arith.constant 0 : i32
    %c0_i32_1 = arith.constant 0 : i32
    return %arg1, %c0_i32, %c0_i32_0 : i32, i32, i32
  }
  func.func @transform_11(%arg0: i32, %arg1: i32) -> (i32, i32, i32) {
    %c0_i32 = arith.constant 0 : i32
    %c0_i32_0 = arith.constant 0 : i32
    %c0_i32_1 = arith.constant 0 : i32
    return %arg1, %c0_i32, %c0_i32_0 : i32, i32, i32
  }
  func.func @transform_12(%arg0: i32, %arg1: i32) -> (i32, i32, i32) {
    %c0_i32 = arith.constant 0 : i32
    %c0_i32_0 = arith.constant 0 : i32
    %c0_i32_1 = arith.constant 0 : i32
    return %arg1, %c0_i32, %c0_i32_0 : i32, i32, i32
  }
  func.func @transform_13(%arg0: i32, %arg1: i32) -> (i32, i32, i32) {
    %c0_i32 = arith.constant 0 : i32
    %c0_i32_0 = arith.constant 0 : i32
    %c0_i32_1 = arith.constant 0 : i32
    return %arg1, %c0_i32, %c0_i32_0 : i32, i32, i32
  }
  func.func @transform_14(%arg0: i32, %arg1: i32) -> (i32, i32, i32) {
    %c0_i32 = arith.constant 0 : i32
    %c0_i32_0 = arith.constant 0 : i32
    %c0_i32_1 = arith.constant 0 : i32
    return %arg1, %c0_i32, %c0_i32_0 : i32, i32, i32
  }
  func.func @transform_15(%arg0: i32, %arg1: i32) -> (i32, i32, i32) {
    %c0_i32 = arith.constant 0 : i32
    %c0_i32_0 = arith.constant 0 : i32
    %c0_i32_1 = arith.constant 0 : i32
    return %arg1, %c0_i32, %c0_i32_0 : i32, i32, i32
  }
  func.func @transform_16(%arg0: i32, %arg1: i32) -> (i32, i32) {
    %c0_i32 = arith.constant 0 : i32
    %c0_i32_0 = arith.constant 0 : i32
    %c0_i32_1 = arith.constant 0 : i32
    return %c0_i32, %c0_i32_0 : i32, i32
  }
  func.func @transform_17(%arg0: i32, %arg1: i32) -> (i32, i32) {
    %c0_i32 = arith.constant 0 : i32
    %c0_i32_0 = arith.constant 0 : i32
    %c0_i32_1 = arith.constant 0 : i32
    return %c0_i32, %c0_i32_0 : i32, i32
  }
  func.func @transform_18(%arg0: i32, %arg1: i32) -> (i32, i32) {
    %c0_i32 = arith.constant 0 : i32
    %c0_i32_0 = arith.constant 0 : i32
    %c0_i32_1 = arith.constant 0 : i32
    return %c0_i32, %c0_i32_0 : i32, i32
  }
  func.func @transform_19(%arg0: i32, %arg1: i32) -> (i32, i32) {
    %c0_i32 = arith.constant 0 : i32
    %c0_i32_0 = arith.constant 0 : i32
    %c0_i32_1 = arith.constant 0 : i32
    return %c0_i32, %c0_i32_0 : i32, i32
  }
  func.func @transform_20(%arg0: i32, %arg1: i32) -> (i32, i32) {
    %c0_i32 = arith.constant 0 : i32
    %c0_i32_0 = arith.constant 0 : i32
    %c0_i32_1 = arith.constant 0 : i32
    return %c0_i32, %c0_i32_0 : i32, i32
  }
  func.func @transform_21(%arg0: i32, %arg1: i32) -> (i32, i32) {
    %c0_i32 = arith.constant 0 : i32
    %c0_i32_0 = arith.constant 0 : i32
    %c0_i32_1 = arith.constant 0 : i32
    return %c0_i32, %c0_i32_0 : i32, i32
  }
  func.func @transform_22(%arg0: i32, %arg1: i32) -> (i32, i32, i32) {
    %c0_i32 = arith.constant 0 : i32
    %c0_i32_0 = arith.constant 0 : i32
    %c0_i32_1 = arith.constant 0 : i32
    return %arg0, %c0_i32, %c0_i32_0 : i32, i32, i32
  }
}

</mosaic_0001>

<llo_original>
// kernel: bert_for_masked_lm.1
$region0: #{bert_for_masked_lm.1}
  #allocation0 [shape = 'u32[]', space=smem, size = 0x4, offset = 0x4, fixed_abs, tag = 'smem constant byte address 0x4 - core index']
  #allocation1 [shape = 'u32[144,128]{1,0:T(1,128)}', space=vmem, size = 0x12000, scoped, tag = 'internal scratch']
  #allocation2 [shape = 'f32[16,32]{1,0:T(8,128)}', space=vmem, size = 0x2000, scoped, tag = 'scratch operand']
  %s0 = inlined_call_operand.vmem [shape: f32[2,8,32], index: 0, kind: input, shape index: {}]
  %s1 = inlined_call_operand.vmem [shape: f32[2,1,8], index: 1, kind: input, shape index: {}]
  %s2 = inlined_call_operand.vmem [shape: f32[1,32], index: 2, kind: input, shape index: {}]
  %s3 = inlined_call_operand.vmem [shape: f32[1,32], index: 3, kind: input, shape index: {}]
  %s4 = inlined_call_operand.vmem [shape: bf16[1,32,96], index: 4, kind: input, shape index: {}]
  %s5 = inlined_call_operand.vmem [shape: f32[1,1,96], index: 5, kind: input, shape index: {}]
  %s6 = inlined_call_operand.vmem [shape: bf16[1,32,32], index: 6, kind: input, shape index: {}]
  %s7 = inlined_call_operand.vmem [shape: f32[1,1,32], index: 7, kind: input, shape index: {}]
  %s8 = inlined_call_operand.vmem [shape: f32[1,1,32], index: 8, kind: input, shape index: {}]
  %s9 = inlined_call_operand.vmem [shape: f32[1,1,32], index: 9, kind: input, shape index: {}]
  %s10 = inlined_call_operand.vmem [shape: bf16[1,32,64], index: 10, kind: input, shape index: {}]
  %s11 = inlined_call_operand.vmem [shape: f32[1,1,64], index: 11, kind: input, shape index: {}]
  %s12 = inlined_call_operand.vmem [shape: bf16[1,64,32], index: 12, kind: input, shape index: {}]
  %s13 = inlined_call_operand.vmem [shape: f32[1,1,32], index: 13, kind: input, shape index: {}]
  %s14 = inlined_call_operand.vmem [shape: f32[1,1,32], index: 14, kind: input, shape index: {}]
  %s15 = inlined_call_operand.vmem [shape: f32[1,1,32], index: 15, kind: input, shape index: {}]
  %s16 = inlined_call_operand.vmem [shape: bf16[32,32], index: 16, kind: input, shape index: {}]
  %s17 = inlined_call_operand.vmem [shape: f32[1,32], index: 17, kind: input, shape index: {}]
  %s18 = inlined_call_operand.vmem [shape: f32[1,32], index: 18, kind: input, shape index: {}]
  %s19 = inlined_call_operand.vmem [shape: f32[1,32], index: 19, kind: input, shape index: {}]
  %s20 = inlined_call_operand.vmem [shape: bf16[32,128], index: 20, kind: input, shape index: {}]
  %s21 = inlined_call_operand.vmem [shape: f32[1,128], index: 21, kind: input, shape index: {}]
  %s22 = inlined_call_operand.hbm [shape: f32[2,8,128], index: 22, kind: output, shape index: {}]
  %s23 = sld [smem:[#allocation0]]
  $region106: #{bert_for_masked_lm.1} parent=0
    _
  %s25 = ssub.s32 1, %s23
  %s26 = scalar_select 0, %s25, %s23
  $region1: #{bert_for_masked_lm.1} parent=0
    #allocation3 [shape = 'u8[8192]{0}', space=vmem, size = 0x2000, scoped, tag = 'output window, operand 0, single buffered']
    #allocation4 [shape = 's32[1]{0}', space=sflag, size = 0x4, scoped, tag = 'scoped memory for bert_for_masked_lm.1']
    %27 = vsyncpa [#allocation4], 0
    // Predicated region
    $region2: #{bert_for_masked_lm.1} parent=1 // pred_check
      _
    $region3: #{bert_for_masked_lm.1} parent=1 // pred_check_branch
      %29 = sbr.rel (0) target = $region5
    $region4: #{bert_for_masked_lm.1} parent=1 // pred_region
      _
    $region5: #{bert_for_masked_lm.1} parent=1 // pred_fallthru
      _
    // Predicated region
    $region6: #{bert_for_masked_lm.1} parent=1 // pred_check
      _
    $region7: #{bert_for_masked_lm.1} parent=1 // pred_check_branch
      %31 = sbr.rel (0) target = $region9
    $region8: #{bert_for_masked_lm.1} parent=1 // pred_region
      _
    $region9: #{bert_for_masked_lm.1} parent=1 // pred_fallthru
      _
    // Predicated region
    $region10: #{bert_for_masked_lm.1} parent=1 // pred_check
      _
    $region11: #{bert_for_masked_lm.1} parent=1 // pred_check_branch
      %33 = sbr.rel (0) target = $region13
    $region12: #{bert_for_masked_lm.1} parent=1 // pred_region
      _
    $region13: #{bert_for_masked_lm.1} parent=1 // pred_fallthru
      _
    // Predicated region
    $region14: #{bert_for_masked_lm.1} parent=1 // pred_check
      _
    $region15: #{bert_for_masked_lm.1} parent=1 // pred_check_branch
      %35 = sbr.rel (0) target = $region17
    $region16: #{bert_for_masked_lm.1} parent=1 // pred_region
      _
    $region17: #{bert_for_masked_lm.1} parent=1 // pred_fallthru
      _
    // Predicated region
    $region18: #{bert_for_masked_lm.1} parent=1 // pred_check
      _
    $region19: #{bert_for_masked_lm.1} parent=1 // pred_check_branch
      %37 = sbr.rel (0) target = $region21
    $region20: #{bert_for_masked_lm.1} parent=1 // pred_region
      _
    $region21: #{bert_for_masked_lm.1} parent=1 // pred_fallthru
      _
    // Predicated region
    $region22: #{bert_for_masked_lm.1} parent=1 // pred_check
      _
    $region23: #{bert_for_masked_lm.1} parent=1 // pred_check_branch
      %39 = sbr.rel (0) target = $region25
    $region24: #{bert_for_masked_lm.1} parent=1 // pred_region
      _
    $region25: #{bert_for_masked_lm.1} parent=1 // pred_fallthru
      _
    // Predicated region
    $region26: #{bert_for_masked_lm.1} parent=1 // pred_check
      _
    $region27: #{bert_for_masked_lm.1} parent=1 // pred_check_branch
      %41 = sbr.rel (0) target = $region29
    $region28: #{bert_for_masked_lm.1} parent=1 // pred_region
      _
    $region29: #{bert_for_masked_lm.1} parent=1 // pred_fallthru
      _
    // Predicated region
    $region30: #{bert_for_masked_lm.1} parent=1 // pred_check
      _
    $region31: #{bert_for_masked_lm.1} parent=1 // pred_check_branch
      %43 = sbr.rel (0) target = $region33
    $region32: #{bert_for_masked_lm.1} parent=1 // pred_region
      _
    $region33: #{bert_for_masked_lm.1} parent=1 // pred_fallthru
      _
    // Predicated region
    $region34: #{bert_for_masked_lm.1} parent=1 // pred_check
      _
    $region35: #{bert_for_masked_lm.1} parent=1 // pred_check_branch
      %45 = sbr.rel (0) target = $region37
    $region36: #{bert_for_masked_lm.1} parent=1 // pred_region
      _
    $region37: #{bert_for_masked_lm.1} parent=1 // pred_fallthru
      _
    // Predicated region
    $region38: #{bert_for_masked_lm.1} parent=1 // pred_check
      _
    $region39: #{bert_for_masked_lm.1} parent=1 // pred_check_branch
      %47 = sbr.rel (0) target = $region41
    $region40: #{bert_for_masked_lm.1} parent=1 // pred_region
      _
    $region41: #{bert_for_masked_lm.1} parent=1 // pred_fallthru
      _
    // Predicated region
    $region42: #{bert_for_masked_lm.1} parent=1 // pred_check
      _
    $region43: #{bert_for_masked_lm.1} parent=1 // pred_check_branch
      %49 = sbr.rel (0) target = $region45
    $region44: #{bert_for_masked_lm.1} parent=1 // pred_region
      _
    $region45: #{bert_for_masked_lm.1} parent=1 // pred_fallthru
      _
    // Predicated region
    $region46: #{bert_for_masked_lm.1} parent=1 // pred_check
      _
    $region47: #{bert_for_masked_lm.1} parent=1 // pred_check_branch
      %51 = sbr.rel (0) target = $region49
    $region48: #{bert_for_masked_lm.1} parent=1 // pred_region
      _
    $region49: #{bert_for_masked_lm.1} parent=1 // pred_fallthru
      _
    // Predicated region
    $region50: #{bert_for_masked_lm.1} parent=1 // pred_check
      _
    $region51: #{bert_for_masked_lm.1} parent=1 // pred_check_branch
      %53 = sbr.rel (0) target = $region53
    $region52: #{bert_for_masked_lm.1} parent=1 // pred_region
      _
    $region53: #{bert_for_masked_lm.1} parent=1 // pred_fallthru
      _
    // Predicated region
    $region54: #{bert_for_masked_lm.1} parent=1 // pred_check
      _
    $region55: #{bert_for_masked_lm.1} parent=1 // pred_check_branch
      %55 = sbr.rel (0) target = $region57
    $region56: #{bert_for_masked_lm.1} parent=1 // pred_region
      _
    $region57: #{bert_for_masked_lm.1} parent=1 // pred_fallthru
      _
    // Predicated region
    $region58: #{bert_for_masked_lm.1} parent=1 // pred_check
      _
    $region59: #{bert_for_masked_lm.1} parent=1 // pred_check_branch
      %57 = sbr.rel (0) target = $region61
    $region60: #{bert_for_masked_lm.1} parent=1 // pred_region
      _
    $region61: #{bert_for_masked_lm.1} parent=1 // pred_fallthru
      _
    // Predicated region
    $region62: #{bert_for_masked_lm.1} parent=1 // pred_check
      _
    $region63: #{bert_for_masked_lm.1} parent=1 // pred_check_branch
      %59 = sbr.rel (0) target = $region65
    $region64: #{bert_for_masked_lm.1} parent=1 // pred_region
      _
    $region65: #{bert_for_masked_lm.1} parent=1 // pred_fallthru
      _
    // Predicated region
    $region66: #{bert_for_masked_lm.1} parent=1 // pred_check
      _
    $region67: #{bert_for_masked_lm.1} parent=1 // pred_check_branch
      %61 = sbr.rel (0) target = $region69
    $region68: #{bert_for_masked_lm.1} parent=1 // pred_region
      _
    $region69: #{bert_for_masked_lm.1} parent=1 // pred_fallthru
      _
    // Predicated region
    $region70: #{bert_for_masked_lm.1} parent=1 // pred_check
      _
    $region71: #{bert_for_masked_lm.1} parent=1 // pred_check_branch
      %63 = sbr.rel (0) target = $region73
    $region72: #{bert_for_masked_lm.1} parent=1 // pred_region
      _
    $region73: #{bert_for_masked_lm.1} parent=1 // pred_fallthru
      _
    // Predicated region
    $region74: #{bert_for_masked_lm.1} parent=1 // pred_check
      _
    $region75: #{bert_for_masked_lm.1} parent=1 // pred_check_branch
      %65 = sbr.rel (0) target = $region77
    $region76: #{bert_for_masked_lm.1} parent=1 // pred_region
      _
    $region77: #{bert_for_masked_lm.1} parent=1 // pred_fallthru
      _
    // Predicated region
    $region78: #{bert_for_masked_lm.1} parent=1 // pred_check
      _
    $region79: #{bert_for_masked_lm.1} parent=1 // pred_check_branch
      %67 = sbr.rel (0) target = $region81
    $region80: #{bert_for_masked_lm.1} parent=1 // pred_region
      _
    $region81: #{bert_for_masked_lm.1} parent=1 // pred_fallthru
      _
    // Predicated region
    $region82: #{bert_for_masked_lm.1} parent=1 // pred_check
      _
    $region83: #{bert_for_masked_lm.1} parent=1 // pred_check_branch
      %69 = sbr.rel (0) target = $region85
    $region84: #{bert_for_masked_lm.1} parent=1 // pred_region
      _
    $region85: #{bert_for_masked_lm.1} parent=1 // pred_fallthru
      _
    // Predicated region
    $region86: #{bert_for_masked_lm.1} parent=1 // pred_check
      _
    $region87: #{bert_for_masked_lm.1} parent=1 // pred_check_branch
      %71 = sbr.rel (0) target = $region89
    $region88: #{bert_for_masked_lm.1} parent=1 // pred_region
      _
    $region89: #{bert_for_masked_lm.1} parent=1 // pred_fallthru
      _
    %p73 = scmp.eq.s32.totalorder 0, 0
    // Predicated region
    $region90: #{bert_for_masked_lm.1} parent=1 // pred_check
      %p74 = pneg %p73
    $region91: #{bert_for_masked_lm.1} parent=1 // pred_check_branch
      %76 = sbr.rel (%p74) target = $region93
    $region92: #{bert_for_masked_lm.1} parent=1 // pred_region
      %v77 = vld [vmem:[%s0] sm:$0xff]
      %v78 = vld [vmem:[%s0 + $0x8] sm:$0xff]
      %v79 = vld [vmem:[%s2] sm:$0x1]
      %v80 = vld [vmem:[%s3] sm:$0x1]
      %vm81 = vcmask 261120
      %v82 = vsel %vm81, %v77, 0.0
      %83 = vadd.xlane.f32.xlu0 %v82
      %v84 = vpop.xlane.xlu0 %83
      %v85 = vsel %vm81, %v78, 0.0
      %86 = vadd.xlane.f32.xlu0 %v85
      %v87 = vpop.xlane.xlu0 %86
      %v88 = vrcp.pop 32.0
      %v89 = vmul.f32 %v84, %v88
      %v90 = vmul.f32 %v87, %v88
      %v91 = vsub.f32 %v77, %v89
      %v92 = vsub.f32 %v78, %v90
      %v93 = vmul.f32 %v91, %v91
      %v94 = vmul.f32 %v92, %v92
      %v95 = vsel %vm81, %v93, 0.0
      %96 = vadd.xlane.f32.xlu0 %v95
      %v97 = vpop.xlane.xlu0 %96
      %v98 = vsel %vm81, %v94, 0.0
      %99 = vadd.xlane.f32.xlu0 %v98
      %v100 = vpop.xlane.xlu0 %99
      %v101 = vmul.f32 %v97, %v88
      %v102 = vmul.f32 %v100, %v88
      %v103 = vadd.f32 %v101, 1e-12
      %v104 = vadd.f32 %v102, 1e-12
      %v105 = vrsqrt.pop %v103
      %v106 = vrsqrt.pop %v104
      %v107 = vmul.f32 %v91, %v105
      %v108 = vmul.f32 %v92, %v106
      %v110 = vlaneseq
      %v111 = vshrl.u32 %v110, 7
      %v112 = vsub.s32 0, %v111
      %v113 = vrot.slane %v79, %v112
      %v115 = vmul.f32 %v107, %v113
      %v116 = vmul.f32 %v108, %v113
      %v118 = vlaneseq
      %v119 = vshrl.u32 %v118, 7
      %v120 = vsub.s32 0, %v119
      %v121 = vrot.slane %v80, %v120
      %v123 = vadd.f32 %v115, %v121
      %v124 = vadd.f32 %v116, %v121
      %125 = vst.msk [vmem:[#allocation2] sm:$0xff] %vm81, %v123
      %126 = vst.msk [vmem:[#allocation2 + $0x8] sm:$0xff] %vm81, %v124
    $region93: #{bert_for_masked_lm.1} parent=1 // pred_fallthru
      _
    %v127 = vld [vmem:[#allocation2] sm:$0xff]
    %v128 = vld [vmem:[#allocation2 + $0x8] sm:$0xff]
    %v129 = vld [vmem:[%s1] sm:$0x1]
    %v130 = vld [vmem:[%s1 + $0x1] sm:$0x1]
    %v131 = vld [vmem:[%s4] sm:$0xf]
    %v132 = vld [vmem:[%s4 + $0x4] sm:$0xf]
    %v133 = vld [vmem:[%s4 + $0x8] sm:$0xf]
    %v134 = vld [vmem:[%s4 + $0xc] sm:$0xf]
    %v135 = vpack.c.bf16 %v128, %v127
    %v136 = vld [vmem:[%s5] sm:$0x1]
    %v138 = vlaneseq
    %v139 = vshrl.u32 %v138, 7
    %v140 = vsub.s32 0, %v139
    %v141 = vrot.slane %v136, %v140
    %v147 = vunpack.c.l.b16 %v131
    %v148 = vunpack.c.l.b16 %v132
    %v149 = vunpack.c.l.b16 %v133
    %v150 = vunpack.c.l.b16 %v134
    %v151 = vpack.c.b16 %v148, %v147
    %v152 = vpack.c.b16 %v150, %v149
    %vm155 = vcmask 261120
    %v157 = vsel %vm155, %v135, 0
    %159 = vmatprep.subr.bf16.mxu0 0
    %160 = vmatpush1.bf16.msra.mxu0 %v151
    %161 = vmatprep.subr.bf16.mxu0 0
    %162 = vmatpush1.bf16.msra.mxu0 %v152
    %163 = vmatprep.subr.bf16.mxu0 0
    %164 = vmatpush1.bf16.msra.mxu0 0
    %165 = vmatprep.subr.bf16.mxu0 0
    %166 = vmatpush1.bf16.msra.mxu0 0
    %167 = vmatprep.subr.bf16.mxu0 0
    %168 = vmatpush1.bf16.msra.mxu0 0
    %169 = vmatprep.subr.bf16.mxu0 0
    %170 = vmatpush1.bf16.msra.mxu0 0
    %171 = vmatprep.subr.bf16.mxu0 0
    %172 = vmatpush1.bf16.msra.mxu0 0
    %173 = vmatprep.subr.bf16.mxu0 0
    %174 = vmatpush1.bf16.msra.mxu0 0
    %175 = vmatprep.subr.bf16.mxu0 0
    %176 = vmatpush1.bf16.msra.mxu0 0
    %177 = vmatprep.subr.bf16.mxu0 0
    %178 = vmatpush1.bf16.msra.mxu0 0
    %179 = vmatprep.subr.bf16.mxu0 0
    %180 = vmatpush1.bf16.msra.mxu0 0
    %181 = vmatprep.subr.bf16.mxu0 0
    %182 = vmatpush1.bf16.msra.mxu0 0
    %183 = vmatprep.subr.bf16.mxu0 0
    %184 = vmatpush1.bf16.msra.mxu0 0
    %185 = vmatprep.subr.bf16.mxu0 0
    %186 = vmatpush1.bf16.msra.mxu0 0
    %187 = vmatprep.subr.bf16.mxu0 0
    %188 = vmatpush1.bf16.msra.mxu0 0
    %189 = vmatprep.subr.bf16.mxu0 0
    %190 = vmatpush1.bf16.msra.mxu0 0
    %191 = vmatprep.mubr.bf16.mxu0 0
    %192 = vmatmul.mubr.bf16.gmra.mrb[0].mxu0 %v157
    %v193 = vpop.f32.mrb[0].mxu0
    %v194 = vadd.f32 %v141, %v193
    %v195 = vpop.f32.mrb[0].mxu0
    %v196 = vpop.f32.mrb[0].mxu0
    %v197 = vadd.f32 %v141, %v196
    %v198 = vpop.f32.mrb[0].mxu0
    %199 = vdwg.mxu0
    %v200 = vpack.c.bf16 %v194, %v194
    %v201 = vpack.c.bf16 %v197, %v197
    %v204 = vlaneseq
    %v205 = vshrl.u32 %v204, 7
    %v206 = vsub.s32 0, %v205
    %v207 = vrot.slane %v129, %v206
    %v208 = vlaneseq
    %v209 = vshrl.u32 %v208, 7
    %v210 = vsub.s32 0, %v209
    %v211 = vrot.slane %v130, %v210
    %215 = vrot.lane.b32.xlu0 %v200, 96
    %v216 = vpop.permute.xlu0 %215
    %vm217 = vcmask 64512
    %v219 = vsel %vm217, %v200, 0
    %v222 = vsel %vm217, %v216, 0
    %224 = vmatprep.subr.bf16.mxu0 0
    %225 = vmatpush1.bf16.xpose.msra.mxu0 %v222
    %226 = vmatprep.subr.bf16.mxu0 0
    %227 = vmatpush1.bf16.xpose.msra.mxu0 0
    %228 = vmatprep.subr.bf16.mxu0 0
    %229 = vmatpush1.bf16.xpose.msra.mxu0 0
    %230 = vmatprep.subr.bf16.mxu0 0
    %231 = vmatpush1.bf16.xpose.msra.mxu0 0
    %232 = vmatprep.subr.bf16.mxu0 0
    %233 = vmatpush1.bf16.xpose.msra.mxu0 0
    %234 = vmatprep.subr.bf16.mxu0 0
    %235 = vmatpush1.bf16.xpose.msra.mxu0 0
    %236 = vmatprep.subr.bf16.mxu0 0
    %237 = vmatpush1.bf16.xpose.msra.mxu0 0
    %238 = vmatprep.subr.bf16.mxu0 0
    %239 = vmatpush1.bf16.xpose.msra.mxu0 0
    %240 = vmatprep.subr.bf16.mxu0 0
    %241 = vmatpush1.bf16.xpose.msra.mxu0 0
    %242 = vmatprep.subr.bf16.mxu0 0
    %243 = vmatpush1.bf16.xpose.msra.mxu0 0
    %244 = vmatprep.subr.bf16.mxu0 0
    %245 = vmatpush1.bf16.xpose.msra.mxu0 0
    %246 = vmatprep.subr.bf16.mxu0 0
    %247 = vmatpush1.bf16.xpose.msra.mxu0 0
    %248 = vmatprep.subr.bf16.mxu0 0
    %249 = vmatpush1.bf16.xpose.msra.mxu0 0
    %250 = vmatprep.subr.bf16.mxu0 0
    %251 = vmatpush1.bf16.xpose.msra.mxu0 0
    %252 = vmatprep.subr.bf16.mxu0 0
    %253 = vmatpush1.bf16.xpose.msra.mxu0 0
    %254 = vmatprep.subr.bf16.mxu0 0
    %255 = vmatpush1.bf16.xpose.msra.mxu0 0
    %256 = vmatprep.mubr.bf16.mxu0 0
    %257 = vmatmul.mubr.bf16.gmra.mrb[0].mxu0 %v219
    %v258 = vpop.f32.mrb[0].mxu0
    %v259 = vadd.f32 %v207, %v258
    %v260 = vpop.f32.mrb[0].mxu0
    %v261 = vpop.f32.mrb[0].mxu0
    %v262 = vpop.f32.mrb[0].mxu0
    %263 = vdwg.mxu0
    %265 = vrot.lane.b32.xlu0 %v201, 96
    %v266 = vpop.permute.xlu0 %265
    %v268 = vsel %vm217, %v201, 0
    %v271 = vsel %vm217, %v266, 0
    %273 = vmatprep.subr.bf16.mxu0 0
    %274 = vmatpush1.bf16.xpose.msra.mxu0 %v271
    %275 = vmatprep.subr.bf16.mxu0 0
    %276 = vmatpush1.bf16.xpose.msra.mxu0 0
    %277 = vmatprep.subr.bf16.mxu0 0
    %278 = vmatpush1.bf16.xpose.msra.mxu0 0
    %279 = vmatprep.subr.bf16.mxu0 0
    %280 = vmatpush1.bf16.xpose.msra.mxu0 0
    %281 = vmatprep.subr.bf16.mxu0 0
    %282 = vmatpush1.bf16.xpose.msra.mxu0 0
    %283 = vmatprep.subr.bf16.mxu0 0
    %284 = vmatpush1.bf16.xpose.msra.mxu0 0
    %285 = vmatprep.subr.bf16.mxu0 0
    %286 = vmatpush1.bf16.xpose.msra.mxu0 0
    %287 = vmatprep.subr.bf16.mxu0 0
    %288 = vmatpush1.bf16.xpose.msra.mxu0 0
    %289 = vmatprep.subr.bf16.mxu0 0
    %290 = vmatpush1.bf16.xpose.msra.mxu0 0
    %291 = vmatprep.subr.bf16.mxu0 0
    %292 = vmatpush1.bf16.xpose.msra.mxu0 0
    %293 = vmatprep.subr.bf16.mxu0 0
    %294 = vmatpush1.bf16.xpose.msra.mxu0 0
    %295 = vmatprep.subr.bf16.mxu0 0
    %296 = vmatpush1.bf16.xpose.msra.mxu0 0
    %297 = vmatprep.subr.bf16.mxu0 0
    %298 = vmatpush1.bf16.xpose.msra.mxu0 0
    %299 = vmatprep.subr.bf16.mxu0 0
    %300 = vmatpush1.bf16.xpose.msra.mxu0 0
    %301 = vmatprep.subr.bf16.mxu0 0
    %302 = vmatpush1.bf16.xpose.msra.mxu0 0
    %303 = vmatprep.subr.bf16.mxu0 0
    %304 = vmatpush1.bf16.xpose.msra.mxu0 0
    %305 = vmatprep.mubr.bf16.mxu0 0
    %306 = vmatmul.mubr.bf16.gmra.mrb[0].mxu0 %v268
    %v307 = vpop.f32.mrb[0].mxu0
    %v308 = vadd.f32 %v211, %v307
    %v309 = vpop.f32.mrb[0].mxu0
    %v310 = vpop.f32.mrb[0].mxu0
    %v311 = vpop.f32.mrb[0].mxu0
    %312 = vdwg.mxu0
    %v313 = vsel %vm217, %v259, -inf
    %314 = vmax.xlane.f32.xlu0 %v313
    %v315 = vpop.xlane.xlu0 %314
    %v316 = vsel %vm217, %v308, -inf
    %317 = vmax.xlane.f32.xlu0 %v316
    %v318 = vpop.xlane.xlu0 %317
    %v319 = vsub.f32 %v259, %v315
    %v320 = vsub.f32 %v308, %v318
    %v321 = vmul.f32 %v319, 1.442695
    %v322 = vpow.pop %v321
    %v323 = vmul.f32 %v320, 1.442695
    %v324 = vpow.pop %v323
    %v325 = vsel %vm217, %v322, 0.0
    %326 = vadd.xlane.f32.xlu0 %v325
    %v327 = vpop.xlane.xlu0 %326
    %v328 = vsel %vm217, %v324, 0.0
    %329 = vadd.xlane.f32.xlu0 %v328
    %v330 = vpop.xlane.xlu0 %329
    %v331 = vrcp.pop %v327
    %v332 = vrcp.pop %v330
    %v333 = vmul.f32 %v322, %v331
    %v334 = vmul.f32 %v324, %v332
    %v335 = vpack.c.bf16 %v333, %v333
    %v336 = vpack.c.bf16 %v334, %v334
    %337 = vrot.lane.b32.xlu0 %v200, 64
    %v338 = vpop.permute.xlu0 %337
    %v340 = vsel %vm217, %v335, 0
    %vm342 = vcmask 1043456
    %v344 = vsel %vm342, %v338, 0
    %346 = vmatprep.subr.bf16.mxu0 0
    %347 = vmatpush1.bf16.msra.mxu0 %v344
    %348 = vmatprep.subr.bf16.mxu0 0
    %349 = vmatpush1.bf16.msra.mxu0 0
    %350 = vmatprep.subr.bf16.mxu0 0
    %351 = vmatpush1.bf16.msra.mxu0 0
    %352 = vmatprep.subr.bf16.mxu0 0
    %353 = vmatpush1.bf16.msra.mxu0 0
    %354 = vmatprep.subr.bf16.mxu0 0
    %355 = vmatpush1.bf16.msra.mxu0 0
    %356 = vmatprep.subr.bf16.mxu0 0
    %357 = vmatpush1.bf16.msra.mxu0 0
    %358 = vmatprep.subr.bf16.mxu0 0
    %359 = vmatpush1.bf16.msra.mxu0 0
    %360 = vmatprep.subr.bf16.mxu0 0
    %361 = vmatpush1.bf16.msra.mxu0 0
    %362 = vmatprep.subr.bf16.mxu0 0
    %363 = vmatpush1.bf16.msra.mxu0 0
    %364 = vmatprep.subr.bf16.mxu0 0
    %365 = vmatpush1.bf16.msra.mxu0 0
    %366 = vmatprep.subr.bf16.mxu0 0
    %367 = vmatpush1.bf16.msra.mxu0 0
    %368 = vmatprep.subr.bf16.mxu0 0
    %369 = vmatpush1.bf16.msra.mxu0 0
    %370 = vmatprep.subr.bf16.mxu0 0
    %371 = vmatpush1.bf16.msra.mxu0 0
    %372 = vmatprep.subr.bf16.mxu0 0
    %373 = vmatpush1.bf16.msra.mxu0 0
    %374 = vmatprep.subr.bf16.mxu0 0
    %375 = vmatpush1.bf16.msra.mxu0 0
    %376 = vmatprep.subr.bf16.mxu0 0
    %377 = vmatpush1.bf16.msra.mxu0 0
    %378 = vmatprep.mubr.bf16.mxu0 0
    %379 = vmatmul.mubr.bf16.gmra.mrb[0].mxu0 %v340
    %v380 = vpop.f32.mrb[0].mxu0
    %v381 = vadd.f32 0.0, %v380
    %v382 = vpop.f32.mrb[0].mxu0
    %v383 = vpop.f32.mrb[0].mxu0
    %v384 = vpop.f32.mrb[0].mxu0
    %385 = vdwg.mxu0
    %386 = vrot.lane.b32.xlu0 %v201, 64
    %v387 = vpop.permute.xlu0 %386
    %v389 = vsel %vm217, %v336, 0
    %v392 = vsel %vm342, %v387, 0
    %394 = vmatprep.subr.bf16.mxu0 0
    %395 = vmatpush1.bf16.msra.mxu0 %v392
    %396 = vmatprep.subr.bf16.mxu0 0
    %397 = vmatpush1.bf16.msra.mxu0 0
    %398 = vmatprep.subr.bf16.mxu0 0
    %399 = vmatpush1.bf16.msra.mxu0 0
    %400 = vmatprep.subr.bf16.mxu0 0
    %401 = vmatpush1.bf16.msra.mxu0 0
    %402 = vmatprep.subr.bf16.mxu0 0
    %403 = vmatpush1.bf16.msra.mxu0 0
    %404 = vmatprep.subr.bf16.mxu0 0
    %405 = vmatpush1.bf16.msra.mxu0 0
    %406 = vmatprep.subr.bf16.mxu0 0
    %407 = vmatpush1.bf16.msra.mxu0 0
    %408 = vmatprep.subr.bf16.mxu0 0
    %409 = vmatpush1.bf16.msra.mxu0 0
    %410 = vmatprep.subr.bf16.mxu0 0
    %411 = vmatpush1.bf16.msra.mxu0 0
    %412 = vmatprep.subr.bf16.mxu0 0
    %413 = vmatpush1.bf16.msra.mxu0 0
    %414 = vmatprep.subr.bf16.mxu0 0
    %415 = vmatpush1.bf16.msra.mxu0 0
    %416 = vmatprep.subr.bf16.mxu0 0
    %417 = vmatpush1.bf16.msra.mxu0 0
    %418 = vmatprep.subr.bf16.mxu0 0
    %419 = vmatpush1.bf16.msra.mxu0 0
    %420 = vmatprep.subr.bf16.mxu0 0
    %421 = vmatpush1.bf16.msra.mxu0 0
    %422 = vmatprep.subr.bf16.mxu0 0
    %423 = vmatpush1.bf16.msra.mxu0 0
    %424 = vmatprep.subr.bf16.mxu0 0
    %425 = vmatpush1.bf16.msra.mxu0 0
    %426 = vmatprep.mubr.bf16.mxu0 0
    %427 = vmatmul.mubr.bf16.gmra.mrb[0].mxu0 %v389
    %v428 = vpop.f32.mrb[0].mxu0
    %v429 = vadd.f32 0.0, %v428
    %v430 = vpop.f32.mrb[0].mxu0
    %v431 = vpop.f32.mrb[0].mxu0
    %v432 = vpop.f32.mrb[0].mxu0
    %433 = vdwg.mxu0
    %434 = vrot.lane.b32.xlu0 %v200, 120
    %v435 = vpop.permute.xlu0 %434
    %436 = vrot.lane.b32.xlu0 %v200, 88
    %v437 = vpop.permute.xlu0 %436
    %v439 = vsel %vm217, %v435, 0
    %v442 = vsel %vm217, %v437, 0
    %444 = vmatprep.subr.bf16.mxu0 0
    %445 = vmatpush1.bf16.xpose.msra.mxu0 %v442
    %446 = vmatprep.subr.bf16.mxu0 0
    %447 = vmatpush1.bf16.xpose.msra.mxu0 0
    %448 = vmatprep.subr.bf16.mxu0 0
    %449 = vmatpush1.bf16.xpose.msra.mxu0 0
    %450 = vmatprep.subr.bf16.mxu0 0
    %451 = vmatpush1.bf16.xpose.msra.mxu0 0
    %452 = vmatprep.subr.bf16.mxu0 0
    %453 = vmatpush1.bf16.xpose.msra.mxu0 0
    %454 = vmatprep.subr.bf16.mxu0 0
    %455 = vmatpush1.bf16.xpose.msra.mxu0 0
    %456 = vmatprep.subr.bf16.mxu0 0
    %457 = vmatpush1.bf16.xpose.msra.mxu0 0
    %458 = vmatprep.subr.bf16.mxu0 0
    %459 = vmatpush1.bf16.xpose.msra.mxu0 0
    %460 = vmatprep.subr.bf16.mxu0 0
    %461 = vmatpush1.bf16.xpose.msra.mxu0 0
    %462 = vmatprep.subr.bf16.mxu0 0
    %463 = vmatpush1.bf16.xpose.msra.mxu0 0
    %464 = vmatprep.subr.bf16.mxu0 0
    %465 = vmatpush1.bf16.xpose.msra.mxu0 0
    %466 = vmatprep.subr.bf16.mxu0 0
    %467 = vmatpush1.bf16.xpose.msra.mxu0 0
    %468 = vmatprep.subr.bf16.mxu0 0
    %469 = vmatpush1.bf16.xpose.msra.mxu0 0
    %470 = vmatprep.subr.bf16.mxu0 0
    %471 = vmatpush1.bf16.xpose.msra.mxu0 0
    %472 = vmatprep.subr.bf16.mxu0 0
    %473 = vmatpush1.bf16.xpose.msra.mxu0 0
    %474 = vmatprep.subr.bf16.mxu0 0
    %475 = vmatpush1.bf16.xpose.msra.mxu0 0
    %476 = vmatprep.mubr.bf16.mxu0 0
    %477 = vmatmul.mubr.bf16.gmra.mrb[0].mxu0 %v439
    %v478 = vpop.f32.mrb[0].mxu0
    %v479 = vadd.f32 %v207, %v478
    %v480 = vpop.f32.mrb[0].mxu0
    %v481 = vpop.f32.mrb[0].mxu0
    %v482 = vpop.f32.mrb[0].mxu0
    %483 = vdwg.mxu0
    %484 = vrot.lane.b32.xlu0 %v201, 120
    %v485 = vpop.permute.xlu0 %484
    %486 = vrot.lane.b32.xlu0 %v201, 88
    %v487 = vpop.permute.xlu0 %486
    %v489 = vsel %vm217, %v485, 0
    %v492 = vsel %vm217, %v487, 0
    %494 = vmatprep.subr.bf16.mxu0 0
    %495 = vmatpush1.bf16.xpose.msra.mxu0 %v492
    %496 = vmatprep.subr.bf16.mxu0 0
    %497 = vmatpush1.bf16.xpose.msra.mxu0 0
    %498 = vmatprep.subr.bf16.mxu0 0
    %499 = vmatpush1.bf16.xpose.msra.mxu0 0
    %500 = vmatprep.subr.bf16.mxu0 0
    %501 = vmatpush1.bf16.xpose.msra.mxu0 0
    %502 = vmatprep.subr.bf16.mxu0 0
    %503 = vmatpush1.bf16.xpose.msra.mxu0 0
    %504 = vmatprep.subr.bf16.mxu0 0
    %505 = vmatpush1.bf16.xpose.msra.mxu0 0
    %506 = vmatprep.subr.bf16.mxu0 0
    %507 = vmatpush1.bf16.xpose.msra.mxu0 0
    %508 = vmatprep.subr.bf16.mxu0 0
    %509 = vmatpush1.bf16.xpose.msra.mxu0 0
    %510 = vmatprep.subr.bf16.mxu0 0
    %511 = vmatpush1.bf16.xpose.msra.mxu0 0
    %512 = vmatprep.subr.bf16.mxu0 0
    %513 = vmatpush1.bf16.xpose.msra.mxu0 0
    %514 = vmatprep.subr.bf16.mxu0 0
    %515 = vmatpush1.bf16.xpose.msra.mxu0 0
    %516 = vmatprep.subr.bf16.mxu0 0
    %517 = vmatpush1.bf16.xpose.msra.mxu0 0
    %518 = vmatprep.subr.bf16.mxu0 0
    %519 = vmatpush1.bf16.xpose.msra.mxu0 0
    %520 = vmatprep.subr.bf16.mxu0 0
    %521 = vmatpush1.bf16.xpose.msra.mxu0 0
    %522 = vmatprep.subr.bf16.mxu0 0
    %523 = vmatpush1.bf16.xpose.msra.mxu0 0
    %524 = vmatprep.subr.bf16.mxu0 0
    %525 = vmatpush1.bf16.xpose.msra.mxu0 0
    %526 = vmatprep.mubr.bf16.mxu0 0
    %527 = vmatmul.mubr.bf16.gmra.mrb[0].mxu0 %v489
    %v528 = vpop.f32.mrb[0].mxu0
    %v529 = vadd.f32 %v211, %v528
    %v530 = vpop.f32.mrb[0].mxu0
    %v531 = vpop.f32.mrb[0].mxu0
    %v532 = vpop.f32.mrb[0].mxu0
    %533 = vdwg.mxu0
    %v534 = vsel %vm217, %v479, -inf
    %535 = vmax.xlane.f32.xlu0 %v534
    %v536 = vpop.xlane.xlu0 %535
    %v537 = vsel %vm217, %v529, -inf
    %538 = vmax.xlane.f32.xlu0 %v537
    %v539 = vpop.xlane.xlu0 %538
    %v540 = vsub.f32 %v479, %v536
    %v541 = vsub.f32 %v529, %v539
    %v542 = vmul.f32 %v540, 1.442695
    %v543 = vpow.pop %v542
    %v544 = vmul.f32 %v541, 1.442695
    %v545 = vpow.pop %v544
    %v546 = vsel %vm217, %v543, 0.0
    %547 = vadd.xlane.f32.xlu0 %v546
    %v548 = vpop.xlane.xlu0 %547
    %v549 = vsel %vm217, %v545, 0.0
    %550 = vadd.xlane.f32.xlu0 %v549
    %v551 = vpop.xlane.xlu0 %550
    %v552 = vrcp.pop %v548
    %v553 = vrcp.pop %v551
    %v554 = vmul.f32 %v543, %v552
    %v555 = vmul.f32 %v545, %v553
    %v556 = vpack.c.bf16 %v554, %v554
    %v557 = vpack.c.bf16 %v555, %v555
    %558 = vrot.lane.b32.xlu0 %v200, 56
    %v559 = vpop.permute.xlu0 %558
    %v561 = vsel %vm217, %v556, 0
    %v564 = vsel %vm342, %v559, 0
    %566 = vmatprep.subr.bf16.mxu0 0
    %567 = vmatpush1.bf16.msra.mxu0 %v564
    %568 = vmatprep.subr.bf16.mxu0 0
    %569 = vmatpush1.bf16.msra.mxu0 0
    %570 = vmatprep.subr.bf16.mxu0 0
    %571 = vmatpush1.bf16.msra.mxu0 0
    %572 = vmatprep.subr.bf16.mxu0 0
    %573 = vmatpush1.bf16.msra.mxu0 0
    %574 = vmatprep.subr.bf16.mxu0 0
    %575 = vmatpush1.bf16.msra.mxu0 0
    %576 = vmatprep.subr.bf16.mxu0 0
    %577 = vmatpush1.bf16.msra.mxu0 0
    %578 = vmatprep.subr.bf16.mxu0 0
    %579 = vmatpush1.bf16.msra.mxu0 0
    %580 = vmatprep.subr.bf16.mxu0 0
    %581 = vmatpush1.bf16.msra.mxu0 0
    %582 = vmatprep.subr.bf16.mxu0 0
    %583 = vmatpush1.bf16.msra.mxu0 0
    %584 = vmatprep.subr.bf16.mxu0 0
    %585 = vmatpush1.bf16.msra.mxu0 0
    %586 = vmatprep.subr.bf16.mxu0 0
    %587 = vmatpush1.bf16.msra.mxu0 0
    %588 = vmatprep.subr.bf16.mxu0 0
    %589 = vmatpush1.bf16.msra.mxu0 0
    %590 = vmatprep.subr.bf16.mxu0 0
    %591 = vmatpush1.bf16.msra.mxu0 0
    %592 = vmatprep.subr.bf16.mxu0 0
    %593 = vmatpush1.bf16.msra.mxu0 0
    %594 = vmatprep.subr.bf16.mxu0 0
    %595 = vmatpush1.bf16.msra.mxu0 0
    %596 = vmatprep.subr.bf16.mxu0 0
    %597 = vmatpush1.bf16.msra.mxu0 0
    %598 = vmatprep.mubr.bf16.mxu0 0
    %599 = vmatmul.mubr.bf16.gmra.mrb[0].mxu0 %v561
    %v600 = vpop.f32.mrb[0].mxu0
    %v601 = vadd.f32 0.0, %v600
    %v602 = vpop.f32.mrb[0].mxu0
    %v603 = vpop.f32.mrb[0].mxu0
    %v604 = vpop.f32.mrb[0].mxu0
    %605 = vdwg.mxu0
    %606 = vrot.lane.b32.xlu0 %v201, 56
    %v607 = vpop.permute.xlu0 %606
    %v609 = vsel %vm217, %v557, 0
    %v612 = vsel %vm342, %v607, 0
    %614 = vmatprep.subr.bf16.mxu0 0
    %615 = vmatpush1.bf16.msra.mxu0 %v612
    %616 = vmatprep.subr.bf16.mxu0 0
    %617 = vmatpush1.bf16.msra.mxu0 0
    %618 = vmatprep.subr.bf16.mxu0 0
    %619 = vmatpush1.bf16.msra.mxu0 0
    %620 = vmatprep.subr.bf16.mxu0 0
    %621 = vmatpush1.bf16.msra.mxu0 0
    %622 = vmatprep.subr.bf16.mxu0 0
    %623 = vmatpush1.bf16.msra.mxu0 0
    %624 = vmatprep.subr.bf16.mxu0 0
    %625 = vmatpush1.bf16.msra.mxu0 0
    %626 = vmatprep.subr.bf16.mxu0 0
    %627 = vmatpush1.bf16.msra.mxu0 0
    %628 = vmatprep.subr.bf16.mxu0 0
    %629 = vmatpush1.bf16.msra.mxu0 0
    %630 = vmatprep.subr.bf16.mxu0 0
    %631 = vmatpush1.bf16.msra.mxu0 0
    %632 = vmatprep.subr.bf16.mxu0 0
    %633 = vmatpush1.bf16.msra.mxu0 0
    %634 = vmatprep.subr.bf16.mxu0 0
    %635 = vmatpush1.bf16.msra.mxu0 0
    %636 = vmatprep.subr.bf16.mxu0 0
    %637 = vmatpush1.bf16.msra.mxu0 0
    %638 = vmatprep.subr.bf16.mxu0 0
    %639 = vmatpush1.bf16.msra.mxu0 0
    %640 = vmatprep.subr.bf16.mxu0 0
    %641 = vmatpush1.bf16.msra.mxu0 0
    %642 = vmatprep.subr.bf16.mxu0 0
    %643 = vmatpush1.bf16.msra.mxu0 0
    %644 = vmatprep.subr.bf16.mxu0 0
    %645 = vmatpush1.bf16.msra.mxu0 0
    %646 = vmatprep.mubr.bf16.mxu0 0
    %647 = vmatmul.mubr.bf16.gmra.mrb[0].mxu0 %v609
    %v648 = vpop.f32.mrb[0].mxu0
    %v649 = vadd.f32 0.0, %v648
    %v650 = vpop.f32.mrb[0].mxu0
    %v651 = vpop.f32.mrb[0].mxu0
    %v652 = vpop.f32.mrb[0].mxu0
    %653 = vdwg.mxu0
    %654 = vrot.lane.b32.xlu0 %v200, 112
    %v655 = vpop.permute.xlu0 %654
    %656 = vrot.lane.b32.xlu0 %v200, 80
    %v657 = vpop.permute.xlu0 %656
    %v659 = vsel %vm217, %v655, 0
    %v662 = vsel %vm217, %v657, 0
    %664 = vmatprep.subr.bf16.mxu0 0
    %665 = vmatpush1.bf16.xpose.msra.mxu0 %v662
    %666 = vmatprep.subr.bf16.mxu0 0
    %667 = vmatpush1.bf16.xpose.msra.mxu0 0
    %668 = vmatprep.subr.bf16.mxu0 0
    %669 = vmatpush1.bf16.xpose.msra.mxu0 0
    %670 = vmatprep.subr.bf16.mxu0 0
    %671 = vmatpush1.bf16.xpose.msra.mxu0 0
    %672 = vmatprep.subr.bf16.mxu0 0
    %673 = vmatpush1.bf16.xpose.msra.mxu0 0
    %674 = vmatprep.subr.bf16.mxu0 0
    %675 = vmatpush1.bf16.xpose.msra.mxu0 0
    %676 = vmatprep.subr.bf16.mxu0 0
    %677 = vmatpush1.bf16.xpose.msra.mxu0 0
    %678 = vmatprep.subr.bf16.mxu0 0
    %679 = vmatpush1.bf16.xpose.msra.mxu0 0
    %680 = vmatprep.subr.bf16.mxu0 0
    %681 = vmatpush1.bf16.xpose.msra.mxu0 0
    %682 = vmatprep.subr.bf16.mxu0 0
    %683 = vmatpush1.bf16.xpose.msra.mxu0 0
    %684 = vmatprep.subr.bf16.mxu0 0
    %685 = vmatpush1.bf16.xpose.msra.mxu0 0
    %686 = vmatprep.subr.bf16.mxu0 0
    %687 = vmatpush1.bf16.xpose.msra.mxu0 0
    %688 = vmatprep.subr.bf16.mxu0 0
    %689 = vmatpush1.bf16.xpose.msra.mxu0 0
    %690 = vmatprep.subr.bf16.mxu0 0
    %691 = vmatpush1.bf16.xpose.msra.mxu0 0
    %692 = vmatprep.subr.bf16.mxu0 0
    %693 = vmatpush1.bf16.xpose.msra.mxu0 0
    %694 = vmatprep.subr.bf16.mxu0 0
    %695 = vmatpush1.bf16.xpose.msra.mxu0 0
    %696 = vmatprep.mubr.bf16.mxu0 0
    %697 = vmatmul.mubr.bf16.gmra.mrb[0].mxu0 %v659
    %v698 = vpop.f32.mrb[0].mxu0
    %v699 = vadd.f32 %v207, %v698
    %v700 = vpop.f32.mrb[0].mxu0
    %v701 = vpop.f32.mrb[0].mxu0
    %v702 = vpop.f32.mrb[0].mxu0
    %703 = vdwg.mxu0
    %704 = vrot.lane.b32.xlu0 %v201, 112
    %v705 = vpop.permute.xlu0 %704
    %706 = vrot.lane.b32.xlu0 %v201, 80
    %v707 = vpop.permute.xlu0 %706
    %v709 = vsel %vm217, %v705, 0
    %v712 = vsel %vm217, %v707, 0
    %714 = vmatprep.subr.bf16.mxu0 0
    %715 = vmatpush1.bf16.xpose.msra.mxu0 %v712
    %716 = vmatprep.subr.bf16.mxu0 0
    %717 = vmatpush1.bf16.xpose.msra.mxu0 0
    %718 = vmatprep.subr.bf16.mxu0 0
    %719 = vmatpush1.bf16.xpose.msra.mxu0 0
    %720 = vmatprep.subr.bf16.mxu0 0
    %721 = vmatpush1.bf16.xpose.msra.mxu0 0
    %722 = vmatprep.subr.bf16.mxu0 0
    %723 = vmatpush1.bf16.xpose.msra.mxu0 0
    %724 = vmatprep.subr.bf16.mxu0 0
    %725 = vmatpush1.bf16.xpose.msra.mxu0 0
    %726 = vmatprep.subr.bf16.mxu0 0
    %727 = vmatpush1.bf16.xpose.msra.mxu0 0
    %728 = vmatprep.subr.bf16.mxu0 0
    %729 = vmatpush1.bf16.xpose.msra.mxu0 0
    %730 = vmatprep.subr.bf16.mxu0 0
    %731 = vmatpush1.bf16.xpose.msra.mxu0 0
    %732 = vmatprep.subr.bf16.mxu0 0
    %733 = vmatpush1.bf16.xpose.msra.mxu0 0
    %734 = vmatprep.subr.bf16.mxu0 0
    %735 = vmatpush1.bf16.xpose.msra.mxu0 0
    %736 = vmatprep.subr.bf16.mxu0 0
    %737 = vmatpush1.bf16.xpose.msra.mxu0 0
    %738 = vmatprep.subr.bf16.mxu0 0
    %739 = vmatpush1.bf16.xpose.msra.mxu0 0
    %740 = vmatprep.subr.bf16.mxu0 0
    %741 = vmatpush1.bf16.xpose.msra.mxu0 0
    %742 = vmatprep.subr.bf16.mxu0 0
    %743 = vmatpush1.bf16.xpose.msra.mxu0 0
    %744 = vmatprep.subr.bf16.mxu0 0
    %745 = vmatpush1.bf16.xpose.msra.mxu0 0
    %746 = vmatprep.mubr.bf16.mxu0 0
    %747 = vmatmul.mubr.bf16.gmra.mrb[0].mxu0 %v709
    %v748 = vpop.f32.mrb[0].mxu0
    %v749 = vadd.f32 %v211, %v748
    %v750 = vpop.f32.mrb[0].mxu0
    %v751 = vpop.f32.mrb[0].mxu0
    %v752 = vpop.f32.mrb[0].mxu0
    %753 = vdwg.mxu0
    %v754 = vsel %vm217, %v699, -inf
    %755 = vmax.xlane.f32.xlu0 %v754
    %v756 = vpop.xlane.xlu0 %755
    %v757 = vsel %vm217, %v749, -inf
    %758 = vmax.xlane.f32.xlu0 %v757
    %v759 = vpop.xlane.xlu0 %758
    %v760 = vsub.f32 %v699, %v756
    %v761 = vsub.f32 %v749, %v759
    %v762 = vmul.f32 %v760, 1.442695
    %v763 = vpow.pop %v762
    %v764 = vmul.f32 %v761, 1.442695
    %v765 = vpow.pop %v764
    %v766 = vsel %vm217, %v763, 0.0
    %767 = vadd.xlane.f32.xlu0 %v766
    %v768 = vpop.xlane.xlu0 %767
    %v769 = vsel %vm217, %v765, 0.0
    %770 = vadd.xlane.f32.xlu0 %v769
    %v771 = vpop.xlane.xlu0 %770
    %v772 = vrcp.pop %v768
    %v773 = vrcp.pop %v771
    %v774 = vmul.f32 %v763, %v772
    %v775 = vmul.f32 %v765, %v773
    %v776 = vpack.c.bf16 %v774, %v774
    %v777 = vpack.c.bf16 %v775, %v775
    %778 = vrot.lane.b32.xlu0 %v200, 48
    %v779 = vpop.permute.xlu0 %778
    %v781 = vsel %vm217, %v776, 0
    %v784 = vsel %vm342, %v779, 0
    %786 = vmatprep.subr.bf16.mxu0 0
    %787 = vmatpush1.bf16.msra.mxu0 %v784
    %788 = vmatprep.subr.bf16.mxu0 0
    %789 = vmatpush1.bf16.msra.mxu0 0
    %790 = vmatprep.subr.bf16.mxu0 0
    %791 = vmatpush1.bf16.msra.mxu0 0
    %792 = vmatprep.subr.bf16.mxu0 0
    %793 = vmatpush1.bf16.msra.mxu0 0
    %794 = vmatprep.subr.bf16.mxu0 0
    %795 = vmatpush1.bf16.msra.mxu0 0
    %796 = vmatprep.subr.bf16.mxu0 0
    %797 = vmatpush1.bf16.msra.mxu0 0
    %798 = vmatprep.subr.bf16.mxu0 0
    %799 = vmatpush1.bf16.msra.mxu0 0
    %800 = vmatprep.subr.bf16.mxu0 0
    %801 = vmatpush1.bf16.msra.mxu0 0
    %802 = vmatprep.subr.bf16.mxu0 0
    %803 = vmatpush1.bf16.msra.mxu0 0
    %804 = vmatprep.subr.bf16.mxu0 0
    %805 = vmatpush1.bf16.msra.mxu0 0
    %806 = vmatprep.subr.bf16.mxu0 0
    %807 = vmatpush1.bf16.msra.mxu0 0
    %808 = vmatprep.subr.bf16.mxu0 0
    %809 = vmatpush1.bf16.msra.mxu0 0
    %810 = vmatprep.subr.bf16.mxu0 0
    %811 = vmatpush1.bf16.msra.mxu0 0
    %812 = vmatprep.subr.bf16.mxu0 0
    %813 = vmatpush1.bf16.msra.mxu0 0
    %814 = vmatprep.subr.bf16.mxu0 0
    %815 = vmatpush1.bf16.msra.mxu0 0
    %816 = vmatprep.subr.bf16.mxu0 0
    %817 = vmatpush1.bf16.msra.mxu0 0
    %818 = vmatprep.mubr.bf16.mxu0 0
    %819 = vmatmul.mubr.bf16.gmra.mrb[0].mxu0 %v781
    %v820 = vpop.f32.mrb[0].mxu0
    %v821 = vadd.f32 0.0, %v820
    %v822 = vpop.f32.mrb[0].mxu0
    %v823 = vpop.f32.mrb[0].mxu0
    %v824 = vpop.f32.mrb[0].mxu0
    %825 = vdwg.mxu0
    %826 = vrot.lane.b32.xlu0 %v201, 48
    %v827 = vpop.permute.xlu0 %826
    %v829 = vsel %vm217, %v777, 0
    %v832 = vsel %vm342, %v827, 0
    %834 = vmatprep.subr.bf16.mxu0 0
    %835 = vmatpush1.bf16.msra.mxu0 %v832
    %836 = vmatprep.subr.bf16.mxu0 0
    %837 = vmatpush1.bf16.msra.mxu0 0
    %838 = vmatprep.subr.bf16.mxu0 0
    %839 = vmatpush1.bf16.msra.mxu0 0
    %840 = vmatprep.subr.bf16.mxu0 0
    %841 = vmatpush1.bf16.msra.mxu0 0
    %842 = vmatprep.subr.bf16.mxu0 0
    %843 = vmatpush1.bf16.msra.mxu0 0
    %844 = vmatprep.subr.bf16.mxu0 0
    %845 = vmatpush1.bf16.msra.mxu0 0
    %846 = vmatprep.subr.bf16.mxu0 0
    %847 = vmatpush1.bf16.msra.mxu0 0
    %848 = vmatprep.subr.bf16.mxu0 0
    %849 = vmatpush1.bf16.msra.mxu0 0
    %850 = vmatprep.subr.bf16.mxu0 0
    %851 = vmatpush1.bf16.msra.mxu0 0
    %852 = vmatprep.subr.bf16.mxu0 0
    %853 = vmatpush1.bf16.msra.mxu0 0
    %854 = vmatprep.subr.bf16.mxu0 0
    %855 = vmatpush1.bf16.msra.mxu0 0
    %856 = vmatprep.subr.bf16.mxu0 0
    %857 = vmatpush1.bf16.msra.mxu0 0
    %858 = vmatprep.subr.bf16.mxu0 0
    %859 = vmatpush1.bf16.msra.mxu0 0
    %860 = vmatprep.subr.bf16.mxu0 0
    %861 = vmatpush1.bf16.msra.mxu0 0
    %862 = vmatprep.subr.bf16.mxu0 0
    %863 = vmatpush1.bf16.msra.mxu0 0
    %864 = vmatprep.subr.bf16.mxu0 0
    %865 = vmatpush1.bf16.msra.mxu0 0
    %866 = vmatprep.mubr.bf16.mxu0 0
    %867 = vmatmul.mubr.bf16.gmra.mrb[0].mxu0 %v829
    %v868 = vpop.f32.mrb[0].mxu0
    %v869 = vadd.f32 0.0, %v868
    %v870 = vpop.f32.mrb[0].mxu0
    %v871 = vpop.f32.mrb[0].mxu0
    %v872 = vpop.f32.mrb[0].mxu0
    %873 = vdwg.mxu0
    %874 = vrot.lane.b32.xlu0 %v200, 104
    %v875 = vpop.permute.xlu0 %874
    %876 = vrot.lane.b32.xlu0 %v200, 72
    %v877 = vpop.permute.xlu0 %876
    %v879 = vsel %vm217, %v875, 0
    %v882 = vsel %vm217, %v877, 0
    %884 = vmatprep.subr.bf16.mxu0 0
    %885 = vmatpush1.bf16.xpose.msra.mxu0 %v882
    %886 = vmatprep.subr.bf16.mxu0 0
    %887 = vmatpush1.bf16.xpose.msra.mxu0 0
    %888 = vmatprep.subr.bf16.mxu0 0
    %889 = vmatpush1.bf16.xpose.msra.mxu0 0
    %890 = vmatprep.subr.bf16.mxu0 0
    %891 = vmatpush1.bf16.xpose.msra.mxu0 0
    %892 = vmatprep.subr.bf16.mxu0 0
    %893 = vmatpush1.bf16.xpose.msra.mxu0 0
    %894 = vmatprep.subr.bf16.mxu0 0
    %895 = vmatpush1.bf16.xpose.msra.mxu0 0
    %896 = vmatprep.subr.bf16.mxu0 0
    %897 = vmatpush1.bf16.xpose.msra.mxu0 0
    %898 = vmatprep.subr.bf16.mxu0 0
    %899 = vmatpush1.bf16.xpose.msra.mxu0 0
    %900 = vmatprep.subr.bf16.mxu0 0
    %901 = vmatpush1.bf16.xpose.msra.mxu0 0
    %902 = vmatprep.subr.bf16.mxu0 0
    %903 = vmatpush1.bf16.xpose.msra.mxu0 0
    %904 = vmatprep.subr.bf16.mxu0 0
    %905 = vmatpush1.bf16.xpose.msra.mxu0 0
    %906 = vmatprep.subr.bf16.mxu0 0
    %907 = vmatpush1.bf16.xpose.msra.mxu0 0
    %908 = vmatprep.subr.bf16.mxu0 0
    %909 = vmatpush1.bf16.xpose.msra.mxu0 0
    %910 = vmatprep.subr.bf16.mxu0 0
    %911 = vmatpush1.bf16.xpose.msra.mxu0 0
    %912 = vmatprep.subr.bf16.mxu0 0
    %913 = vmatpush1.bf16.xpose.msra.mxu0 0
    %914 = vmatprep.subr.bf16.mxu0 0
    %915 = vmatpush1.bf16.xpose.msra.mxu0 0
    %916 = vmatprep.mubr.bf16.mxu0 0
    %917 = vmatmul.mubr.bf16.gmra.mrb[0].mxu0 %v879
    %v918 = vpop.f32.mrb[0].mxu0
    %v919 = vadd.f32 %v207, %v918
    %v920 = vpop.f32.mrb[0].mxu0
    %v921 = vpop.f32.mrb[0].mxu0
    %v922 = vpop.f32.mrb[0].mxu0
    %923 = vdwg.mxu0
    %924 = vrot.lane.b32.xlu0 %v201, 104
    %v925 = vpop.permute.xlu0 %924
    %926 = vrot.lane.b32.xlu0 %v201, 72
    %v927 = vpop.permute.xlu0 %926
    %v929 = vsel %vm217, %v925, 0
    %v932 = vsel %vm217, %v927, 0
    %934 = vmatprep.subr.bf16.mxu0 0
    %935 = vmatpush1.bf16.xpose.msra.mxu0 %v932
    %936 = vmatprep.subr.bf16.mxu0 0
    %937 = vmatpush1.bf16.xpose.msra.mxu0 0
    %938 = vmatprep.subr.bf16.mxu0 0
    %939 = vmatpush1.bf16.xpose.msra.mxu0 0
    %940 = vmatprep.subr.bf16.mxu0 0
    %941 = vmatpush1.bf16.xpose.msra.mxu0 0
    %942 = vmatprep.subr.bf16.mxu0 0
    %943 = vmatpush1.bf16.xpose.msra.mxu0 0
    %944 = vmatprep.subr.bf16.mxu0 0
    %945 = vmatpush1.bf16.xpose.msra.mxu0 0
    %946 = vmatprep.subr.bf16.mxu0 0
    %947 = vmatpush1.bf16.xpose.msra.mxu0 0
    %948 = vmatprep.subr.bf16.mxu0 0
    %949 = vmatpush1.bf16.xpose.msra.mxu0 0
    %950 = vmatprep.subr.bf16.mxu0 0
    %951 = vmatpush1.bf16.xpose.msra.mxu0 0
    %952 = vmatprep.subr.bf16.mxu0 0
    %953 = vmatpush1.bf16.xpose.msra.mxu0 0
    %954 = vmatprep.subr.bf16.mxu0 0
    %955 = vmatpush1.bf16.xpose.msra.mxu0 0
    %956 = vmatprep.subr.bf16.mxu0 0
    %957 = vmatpush1.bf16.xpose.msra.mxu0 0
    %958 = vmatprep.subr.bf16.mxu0 0
    %959 = vmatpush1.bf16.xpose.msra.mxu0 0
    %960 = vmatprep.subr.bf16.mxu0 0
    %961 = vmatpush1.bf16.xpose.msra.mxu0 0
    %962 = vmatprep.subr.bf16.mxu0 0
    %963 = vmatpush1.bf16.xpose.msra.mxu0 0
    %964 = vmatprep.subr.bf16.mxu0 0
    %965 = vmatpush1.bf16.xpose.msra.mxu0 0
    %966 = vmatprep.mubr.bf16.mxu0 0
    %967 = vmatmul.mubr.bf16.gmra.mrb[0].mxu0 %v929
    %v968 = vpop.f32.mrb[0].mxu0
    %v969 = vadd.f32 %v211, %v968
    %v970 = vpop.f32.mrb[0].mxu0
    %v971 = vpop.f32.mrb[0].mxu0
    %v972 = vpop.f32.mrb[0].mxu0
    %973 = vdwg.mxu0
    %v974 = vsel %vm217, %v919, -inf
    %975 = vmax.xlane.f32.xlu0 %v974
    %v976 = vpop.xlane.xlu0 %975
    %v977 = vsel %vm217, %v969, -inf
    %978 = vmax.xlane.f32.xlu0 %v977
    %v979 = vpop.xlane.xlu0 %978
    %v980 = vsub.f32 %v919, %v976
    %v981 = vsub.f32 %v969, %v979
    %v982 = vmul.f32 %v980, 1.442695
    %v983 = vpow.pop %v982
    %v984 = vmul.f32 %v981, 1.442695
    %v985 = vpow.pop %v984
    %v986 = vsel %vm217, %v983, 0.0
    %987 = vadd.xlane.f32.xlu0 %v986
    %v988 = vpop.xlane.xlu0 %987
    %v989 = vsel %vm217, %v985, 0.0
    %990 = vadd.xlane.f32.xlu0 %v989
    %v991 = vpop.xlane.xlu0 %990
    %v992 = vrcp.pop %v988
    %v993 = vrcp.pop %v991
    %v994 = vmul.f32 %v983, %v992
    %v995 = vmul.f32 %v985, %v993
    %v996 = vpack.c.bf16 %v994, %v994
    %v997 = vpack.c.bf16 %v995, %v995
    %998 = vrot.lane.b32.xlu0 %v200, 40
    %v999 = vpop.permute.xlu0 %998
    %v1001 = vsel %vm217, %v996, 0
    %v1004 = vsel %vm342, %v999, 0
    %1006 = vmatprep.subr.bf16.mxu0 0
    %1007 = vmatpush1.bf16.msra.mxu0 %v1004
    %1008 = vmatprep.subr.bf16.mxu0 0
    %1009 = vmatpush1.bf16.msra.mxu0 0
    %1010 = vmatprep.subr.bf16.mxu0 0
    %1011 = vmatpush1.bf16.msra.mxu0 0
    %1012 = vmatprep.subr.bf16.mxu0 0
    %1013 = vmatpush1.bf16.msra.mxu0 0
    %1014 = vmatprep.subr.bf16.mxu0 0
    %1015 = vmatpush1.bf16.msra.mxu0 0
    %1016 = vmatprep.subr.bf16.mxu0 0
    %1017 = vmatpush1.bf16.msra.mxu0 0
    %1018 = vmatprep.subr.bf16.mxu0 0
    %1019 = vmatpush1.bf16.msra.mxu0 0
    %1020 = vmatprep.subr.bf16.mxu0 0
    %1021 = vmatpush1.bf16.msra.mxu0 0
    %1022 = vmatprep.subr.bf16.mxu0 0
    %1023 = vmatpush1.bf16.msra.mxu0 0
    %1024 = vmatprep.subr.bf16.mxu0 0
    %1025 = vmatpush1.bf16.msra.mxu0 0
    %1026 = vmatprep.subr.bf16.mxu0 0
    %1027 = vmatpush1.bf16.msra.mxu0 0
    %1028 = vmatprep.subr.bf16.mxu0 0
    %1029 = vmatpush1.bf16.msra.mxu0 0
    %1030 = vmatprep.subr.bf16.mxu0 0
    %1031 = vmatpush1.bf16.msra.mxu0 0
    %1032 = vmatprep.subr.bf16.mxu0 0
    %1033 = vmatpush1.bf16.msra.mxu0 0
    %1034 = vmatprep.subr.bf16.mxu0 0
    %1035 = vmatpush1.bf16.msra.mxu0 0
    %1036 = vmatprep.subr.bf16.mxu0 0
    %1037 = vmatpush1.bf16.msra.mxu0 0
    %1038 = vmatprep.mubr.bf16.mxu0 0
    %1039 = vmatmul.mubr.bf16.gmra.mrb[0].mxu0 %v1001
    %v1040 = vpop.f32.mrb[0].mxu0
    %v1041 = vadd.f32 0.0, %v1040
    %v1042 = vpop.f32.mrb[0].mxu0
    %v1043 = vpop.f32.mrb[0].mxu0
    %v1044 = vpop.f32.mrb[0].mxu0
    %1045 = vdwg.mxu0
    %1046 = vrot.lane.b32.xlu0 %v201, 40
    %v1047 = vpop.permute.xlu0 %1046
    %v1049 = vsel %vm217, %v997, 0
    %v1052 = vsel %vm342, %v1047, 0
    %1054 = vmatprep.subr.bf16.mxu0 0
    %1055 = vmatpush1.bf16.msra.mxu0 %v1052
    %1056 = vmatprep.subr.bf16.mxu0 0
    %1057 = vmatpush1.bf16.msra.mxu0 0
    %1058 = vmatprep.subr.bf16.mxu0 0
    %1059 = vmatpush1.bf16.msra.mxu0 0
    %1060 = vmatprep.subr.bf16.mxu0 0
    %1061 = vmatpush1.bf16.msra.mxu0 0
    %1062 = vmatprep.subr.bf16.mxu0 0
    %1063 = vmatpush1.bf16.msra.mxu0 0
    %1064 = vmatprep.subr.bf16.mxu0 0
    %1065 = vmatpush1.bf16.msra.mxu0 0
    %1066 = vmatprep.subr.bf16.mxu0 0
    %1067 = vmatpush1.bf16.msra.mxu0 0
    %1068 = vmatprep.subr.bf16.mxu0 0
    %1069 = vmatpush1.bf16.msra.mxu0 0
    %1070 = vmatprep.subr.bf16.mxu0 0
    %1071 = vmatpush1.bf16.msra.mxu0 0
    %1072 = vmatprep.subr.bf16.mxu0 0
    %1073 = vmatpush1.bf16.msra.mxu0 0
    %1074 = vmatprep.subr.bf16.mxu0 0
    %1075 = vmatpush1.bf16.msra.mxu0 0
    %1076 = vmatprep.subr.bf16.mxu0 0
    %1077 = vmatpush1.bf16.msra.mxu0 0
    %1078 = vmatprep.subr.bf16.mxu0 0
    %1079 = vmatpush1.bf16.msra.mxu0 0
    %1080 = vmatprep.subr.bf16.mxu0 0
    %1081 = vmatpush1.bf16.msra.mxu0 0
    %1082 = vmatprep.subr.bf16.mxu0 0
    %1083 = vmatpush1.bf16.msra.mxu0 0
    %1084 = vmatprep.subr.bf16.mxu0 0
    %1085 = vmatpush1.bf16.msra.mxu0 0
    %1086 = vmatprep.mubr.bf16.mxu0 0
    %1087 = vmatmul.mubr.bf16.gmra.mrb[0].mxu0 %v1049
    %v1088 = vpop.f32.mrb[0].mxu0
    %v1089 = vadd.f32 0.0, %v1088
    %v1090 = vpop.f32.mrb[0].mxu0
    %v1091 = vpop.f32.mrb[0].mxu0
    %v1092 = vpop.f32.mrb[0].mxu0
    %1093 = vdwg.mxu0
    %1096 = vrot.lane.b32.xlu0 %v601, 8
    %v1097 = vpop.permute.xlu0 %1096
    %1098 = vrot.lane.b32.xlu0 %v649, 8
    %v1099 = vpop.permute.xlu0 %1098
    %1104 = vrot.lane.b32.xlu0 %v821, 16
    %v1105 = vpop.permute.xlu0 %1104
    %1106 = vrot.lane.b32.xlu0 %v869, 16
    %v1107 = vpop.permute.xlu0 %1106
    %1112 = vrot.lane.b32.xlu0 %v1041, 24
    %v1113 = vpop.permute.xlu0 %1112
    %1114 = vrot.lane.b32.xlu0 %v1089, 24
    %v1115 = vpop.permute.xlu0 %1114
    %v1118 = vsel %vm217, %v381, %v1097
    %v1119 = vsel %vm217, %v429, %v1099
    %vm1120 = vcmask 130048
    %v1121 = vsel %vm1120, %v1118, %v1105
    %v1122 = vsel %vm1120, %v1119, %v1107
    %vm1123 = vcmask 195584
    %v1124 = vsel %vm1123, %v1121, %v1113
    %v1125 = vsel %vm1123, %v1122, %v1115
    %v1126 = vld [vmem:[%s6] sm:$0xf]
    %v1127 = vld [vmem:[%s6 + $0x4] sm:$0xf]
    %v1128 = vld [vmem:[%s6 + $0x8] sm:$0xf]
    %v1129 = vld [vmem:[%s6 + $0xc] sm:$0xf]
    %v1130 = vpack.c.bf16 %v1125, %v1124
    %v1131 = vld [vmem:[%s7] sm:$0x1]
    %v1133 = vlaneseq
    %v1134 = vshrl.u32 %v1133, 7
    %v1135 = vsub.s32 0, %v1134
    %v1136 = vrot.slane %v1131, %v1135
    %v1142 = vunpack.c.l.b16 %v1126
    %v1143 = vunpack.c.l.b16 %v1127
    %v1144 = vunpack.c.l.b16 %v1128
    %v1145 = vunpack.c.l.b16 %v1129
    %v1146 = vpack.c.b16 %v1143, %v1142
    %v1147 = vpack.c.b16 %v1145, %v1144
    %v1151 = vsel %vm155, %v1130, 0
    %1153 = vmatprep.subr.bf16.mxu0 0
    %1154 = vmatpush1.bf16.msra.mxu0 %v1146
    %1155 = vmatprep.subr.bf16.mxu0 0
    %1156 = vmatpush1.bf16.msra.mxu0 %v1147
    %1157 = vmatprep.subr.bf16.mxu0 0
    %1158 = vmatpush1.bf16.msra.mxu0 0
    %1159 = vmatprep.subr.bf16.mxu0 0
    %1160 = vmatpush1.bf16.msra.mxu0 0
    %1161 = vmatprep.subr.bf16.mxu0 0
    %1162 = vmatpush1.bf16.msra.mxu0 0
    %1163 = vmatprep.subr.bf16.mxu0 0
    %1164 = vmatpush1.bf16.msra.mxu0 0
    %1165 = vmatprep.subr.bf16.mxu0 0
    %1166 = vmatpush1.bf16.msra.mxu0 0
    %1167 = vmatprep.subr.bf16.mxu0 0
    %1168 = vmatpush1.bf16.msra.mxu0 0
    %1169 = vmatprep.subr.bf16.mxu0 0
    %1170 = vmatpush1.bf16.msra.mxu0 0
    %1171 = vmatprep.subr.bf16.mxu0 0
    %1172 = vmatpush1.bf16.msra.mxu0 0
    %1173 = vmatprep.subr.bf16.mxu0 0
    %1174 = vmatpush1.bf16.msra.mxu0 0
    %1175 = vmatprep.subr.bf16.mxu0 0
    %1176 = vmatpush1.bf16.msra.mxu0 0
    %1177 = vmatprep.subr.bf16.mxu0 0
    %1178 = vmatpush1.bf16.msra.mxu0 0
    %1179 = vmatprep.subr.bf16.mxu0 0
    %1180 = vmatpush1.bf16.msra.mxu0 0
    %1181 = vmatprep.subr.bf16.mxu0 0
    %1182 = vmatpush1.bf16.msra.mxu0 0
    %1183 = vmatprep.subr.bf16.mxu0 0
    %1184 = vmatpush1.bf16.msra.mxu0 0
    %1185 = vmatprep.mubr.bf16.mxu0 0
    %1186 = vmatmul.mubr.bf16.gmra.mrb[0].mxu0 %v1151
    %v1187 = vpop.f32.mrb[0].mxu0
    %v1188 = vadd.f32 %v1136, %v1187
    %v1189 = vpop.f32.mrb[0].mxu0
    %v1190 = vpop.f32.mrb[0].mxu0
    %v1191 = vadd.f32 %v1136, %v1190
    %v1192 = vpop.f32.mrb[0].mxu0
    %1193 = vdwg.mxu0
    %v1194 = vadd.f32 %v1188, %v127
    %v1195 = vadd.f32 %v1191, %v128
    %v1196 = vld [vmem:[%s8] sm:$0x1]
    %v1197 = vld [vmem:[%s9] sm:$0x1]
    %v1198 = vsel %vm155, %v1194, 0.0
    %1199 = vadd.xlane.f32.xlu0 %v1198
    %v1200 = vpop.xlane.xlu0 %1199
    %v1201 = vsel %vm155, %v1195, 0.0
    %1202 = vadd.xlane.f32.xlu0 %v1201
    %v1203 = vpop.xlane.xlu0 %1202
    %v1204 = vrcp.pop 32.0
    %v1205 = vmul.f32 %v1200, %v1204
    %v1206 = vmul.f32 %v1203, %v1204
    %v1207 = vsub.f32 %v1194, %v1205
    %v1208 = vsub.f32 %v1195, %v1206
    %v1209 = vmul.f32 %v1207, %v1207
    %v1210 = vmul.f32 %v1208, %v1208
    %v1211 = vsel %vm155, %v1209, 0.0
    %1212 = vadd.xlane.f32.xlu0 %v1211
    %v1213 = vpop.xlane.xlu0 %1212
    %v1214 = vsel %vm155, %v1210, 0.0
    %1215 = vadd.xlane.f32.xlu0 %v1214
    %v1216 = vpop.xlane.xlu0 %1215
    %v1217 = vmul.f32 %v1213, %v1204
    %v1218 = vmul.f32 %v1216, %v1204
    %v1219 = vadd.f32 %v1217, 1e-12
    %v1220 = vadd.f32 %v1218, 1e-12
    %v1221 = vrsqrt.pop %v1219
    %v1222 = vrsqrt.pop %v1220
    %v1223 = vmul.f32 %v1207, %v1221
    %v1224 = vmul.f32 %v1208, %v1222
    %v1226 = vlaneseq
    %v1227 = vshrl.u32 %v1226, 7
    %v1228 = vsub.s32 0, %v1227
    %v1229 = vrot.slane %v1196, %v1228
    %v1231 = vmul.f32 %v1223, %v1229
    %v1232 = vmul.f32 %v1224, %v1229
    %v1234 = vlaneseq
    %v1235 = vshrl.u32 %v1234, 7
    %v1236 = vsub.s32 0, %v1235
    %v1237 = vrot.slane %v1197, %v1236
    %v1239 = vadd.f32 %v1231, %v1237
    %v1240 = vadd.f32 %v1232, %v1237
    %v1241 = vld [vmem:[%s10] sm:$0xf]
    %v1242 = vld [vmem:[%s10 + $0x4] sm:$0xf]
    %v1243 = vld [vmem:[%s10 + $0x8] sm:$0xf]
    %v1244 = vld [vmem:[%s10 + $0xc] sm:$0xf]
    %v1245 = vpack.c.bf16 %v1240, %v1239
    %v1246 = vld [vmem:[%s11] sm:$0x1]
    %v1248 = vlaneseq
    %v1249 = vshrl.u32 %v1248, 7
    %v1250 = vsub.s32 0, %v1249
    %v1251 = vrot.slane %v1246, %v1250
    %v1257 = vunpack.c.l.b16 %v1241
    %v1258 = vunpack.c.l.b16 %v1242
    %v1259 = vunpack.c.l.b16 %v1243
    %v1260 = vunpack.c.l.b16 %v1244
    %v1261 = vpack.c.b16 %v1258, %v1257
    %v1262 = vpack.c.b16 %v1260, %v1259
    %v1266 = vsel %vm155, %v1245, 0
    %1268 = vmatprep.subr.bf16.mxu0 0
    %1269 = vmatpush1.bf16.msra.mxu0 %v1261
    %1270 = vmatprep.subr.bf16.mxu0 0
    %1271 = vmatpush1.bf16.msra.mxu0 %v1262
    %1272 = vmatprep.subr.bf16.mxu0 0
    %1273 = vmatpush1.bf16.msra.mxu0 0
    %1274 = vmatprep.subr.bf16.mxu0 0
    %1275 = vmatpush1.bf16.msra.mxu0 0
    %1276 = vmatprep.subr.bf16.mxu0 0
    %1277 = vmatpush1.bf16.msra.mxu0 0
    %1278 = vmatprep.subr.bf16.mxu0 0
    %1279 = vmatpush1.bf16.msra.mxu0 0
    %1280 = vmatprep.subr.bf16.mxu0 0
    %1281 = vmatpush1.bf16.msra.mxu0 0
    %1282 = vmatprep.subr.bf16.mxu0 0
    %1283 = vmatpush1.bf16.msra.mxu0 0
    %1284 = vmatprep.subr.bf16.mxu0 0
    %1285 = vmatpush1.bf16.msra.mxu0 0
    %1286 = vmatprep.subr.bf16.mxu0 0
    %1287 = vmatpush1.bf16.msra.mxu0 0
    %1288 = vmatprep.subr.bf16.mxu0 0
    %1289 = vmatpush1.bf16.msra.mxu0 0
    %1290 = vmatprep.subr.bf16.mxu0 0
    %1291 = vmatpush1.bf16.msra.mxu0 0
    %1292 = vmatprep.subr.bf16.mxu0 0
    %1293 = vmatpush1.bf16.msra.mxu0 0
    %1294 = vmatprep.subr.bf16.mxu0 0
    %1295 = vmatpush1.bf16.msra.mxu0 0
    %1296 = vmatprep.subr.bf16.mxu0 0
    %1297 = vmatpush1.bf16.msra.mxu0 0
    %1298 = vmatprep.subr.bf16.mxu0 0
    %1299 = vmatpush1.bf16.msra.mxu0 0
    %1300 = vmatprep.mubr.bf16.mxu0 0
    %1301 = vmatmul.mubr.bf16.gmra.mrb[0].mxu0 %v1266
    %v1302 = vpop.f32.mrb[0].mxu0
    %v1303 = vadd.f32 %v1251, %v1302
    %v1304 = vpop.f32.mrb[0].mxu0
    %v1305 = vpop.f32.mrb[0].mxu0
    %v1306 = vadd.f32 %v1251, %v1305
    %v1307 = vpop.f32.mrb[0].mxu0
    %1308 = vdwg.mxu0
    %v1309 = vmul.f32 %v1303, 0.5
    %v1310 = vmul.f32 %v1306, 0.5
    %v1311 = vmul.f32 %v1303, 0.044715
    %v1312 = vmul.f32 %v1306, 0.044715
    %v1313 = vmul.f32 %v1311, %v1303
    %v1314 = vmul.f32 %v1312, %v1306
    %v1315 = vmul.f32 %v1313, %v1303
    %v1316 = vmul.f32 %v1314, %v1306
    %v1317 = vadd.f32 %v1303, %v1315
    %v1318 = vadd.f32 %v1306, %v1316
    %v1319 = vmul.f32 %v1317, 0.7978846
    %v1320 = vmul.f32 %v1318, 0.7978846
    %v1321 = vtanh.pop %v1319
    %v1322 = vtanh.pop %v1320
    %v1323 = vadd.f32 %v1321, 1.0
    %v1324 = vadd.f32 %v1322, 1.0
    %v1325 = vmul.f32 %v1309, %v1323
    %v1326 = vmul.f32 %v1310, %v1324
    %v1327 = vld [vmem:[%s12] sm:$0xf]
    %v1328 = vld [vmem:[%s12 + $0x4] sm:$0xf]
    %v1329 = vld [vmem:[%s12 + $0x8] sm:$0xf]
    %v1330 = vld [vmem:[%s12 + $0xc] sm:$0xf]
    %v1331 = vld [vmem:[%s12 + $0x10] sm:$0xf]
    %v1332 = vld [vmem:[%s12 + $0x14] sm:$0xf]
    %v1333 = vld [vmem:[%s12 + $0x18] sm:$0xf]
    %v1334 = vld [vmem:[%s12 + $0x1c] sm:$0xf]
    %v1335 = vpack.c.bf16 %v1326, %v1325
    %v1336 = vld [vmem:[%s13] sm:$0x1]
    %v1338 = vlaneseq
    %v1339 = vshrl.u32 %v1338, 7
    %v1340 = vsub.s32 0, %v1339
    %v1341 = vrot.slane %v1336, %v1340
    %v1351 = vunpack.c.l.b16 %v1327
    %v1352 = vunpack.c.l.b16 %v1328
    %v1353 = vunpack.c.l.b16 %v1329
    %v1354 = vunpack.c.l.b16 %v1330
    %v1355 = vunpack.c.l.b16 %v1331
    %v1356 = vunpack.c.l.b16 %v1332
    %v1357 = vunpack.c.l.b16 %v1333
    %v1358 = vunpack.c.l.b16 %v1334
    %v1359 = vpack.c.b16 %v1352, %v1351
    %v1360 = vpack.c.b16 %v1354, %v1353
    %v1361 = vpack.c.b16 %v1356, %v1355
    %v1362 = vpack.c.b16 %v1358, %v1357
    %vm1367 = vcmask 523264
    %v1369 = vsel %vm1367, %v1335, 0
    %1371 = vmatprep.subr.bf16.mxu0 0
    %1372 = vmatpush1.bf16.msra.mxu0 %v1359
    %1373 = vmatprep.subr.bf16.mxu0 0
    %1374 = vmatpush1.bf16.msra.mxu0 %v1360
    %1375 = vmatprep.subr.bf16.mxu0 0
    %1376 = vmatpush1.bf16.msra.mxu0 %v1361
    %1377 = vmatprep.subr.bf16.mxu0 0
    %1378 = vmatpush1.bf16.msra.mxu0 %v1362
    %1379 = vmatprep.subr.bf16.mxu0 0
    %1380 = vmatpush1.bf16.msra.mxu0 0
    %1381 = vmatprep.subr.bf16.mxu0 0
    %1382 = vmatpush1.bf16.msra.mxu0 0
    %1383 = vmatprep.subr.bf16.mxu0 0
    %1384 = vmatpush1.bf16.msra.mxu0 0
    %1385 = vmatprep.subr.bf16.mxu0 0
    %1386 = vmatpush1.bf16.msra.mxu0 0
    %1387 = vmatprep.subr.bf16.mxu0 0
    %1388 = vmatpush1.bf16.msra.mxu0 0
    %1389 = vmatprep.subr.bf16.mxu0 0
    %1390 = vmatpush1.bf16.msra.mxu0 0
    %1391 = vmatprep.subr.bf16.mxu0 0
    %1392 = vmatpush1.bf16.msra.mxu0 0
    %1393 = vmatprep.subr.bf16.mxu0 0
    %1394 = vmatpush1.bf16.msra.mxu0 0
    %1395 = vmatprep.subr.bf16.mxu0 0
    %1396 = vmatpush1.bf16.msra.mxu0 0
    %1397 = vmatprep.subr.bf16.mxu0 0
    %1398 = vmatpush1.bf16.msra.mxu0 0
    %1399 = vmatprep.subr.bf16.mxu0 0
    %1400 = vmatpush1.bf16.msra.mxu0 0
    %1401 = vmatprep.subr.bf16.mxu0 0
    %1402 = vmatpush1.bf16.msra.mxu0 0
    %1403 = vmatprep.mubr.bf16.mxu0 0
    %1404 = vmatmul.mubr.bf16.gmra.mrb[0].mxu0 %v1369
    %v1405 = vpop.f32.mrb[0].mxu0
    %v1406 = vadd.f32 %v1341, %v1405
    %v1407 = vpop.f32.mrb[0].mxu0
    %v1408 = vpop.f32.mrb[0].mxu0
    %v1409 = vadd.f32 %v1341, %v1408
    %v1410 = vpop.f32.mrb[0].mxu0
    %1411 = vdwg.mxu0
    %v1412 = vadd.f32 %v1406, %v1239
    %v1413 = vadd.f32 %v1409, %v1240
    %v1414 = vld [vmem:[%s14] sm:$0x1]
    %v1415 = vld [vmem:[%s15] sm:$0x1]
    %v1416 = vsel %vm155, %v1412, 0.0
    %1417 = vadd.xlane.f32.xlu0 %v1416
    %v1418 = vpop.xlane.xlu0 %1417
    %v1419 = vsel %vm155, %v1413, 0.0
    %1420 = vadd.xlane.f32.xlu0 %v1419
    %v1421 = vpop.xlane.xlu0 %1420
    %v1422 = vmul.f32 %v1418, %v1204
    %v1423 = vmul.f32 %v1421, %v1204
    %v1424 = vsub.f32 %v1412, %v1422
    %v1425 = vsub.f32 %v1413, %v1423
    %v1426 = vmul.f32 %v1424, %v1424
    %v1427 = vmul.f32 %v1425, %v1425
    %v1428 = vsel %vm155, %v1426, 0.0
    %1429 = vadd.xlane.f32.xlu0 %v1428
    %v1430 = vpop.xlane.xlu0 %1429
    %v1431 = vsel %vm155, %v1427, 0.0
    %1432 = vadd.xlane.f32.xlu0 %v1431
    %v1433 = vpop.xlane.xlu0 %1432
    %v1434 = vmul.f32 %v1430, %v1204
    %v1435 = vmul.f32 %v1433, %v1204
    %v1436 = vadd.f32 %v1434, 1e-12
    %v1437 = vadd.f32 %v1435, 1e-12
    %v1438 = vrsqrt.pop %v1436
    %v1439 = vrsqrt.pop %v1437
    %v1440 = vmul.f32 %v1424, %v1438
    %v1441 = vmul.f32 %v1425, %v1439
    %v1443 = vlaneseq
    %v1444 = vshrl.u32 %v1443, 7
    %v1445 = vsub.s32 0, %v1444
    %v1446 = vrot.slane %v1414, %v1445
    %v1448 = vmul.f32 %v1440, %v1446
    %v1449 = vmul.f32 %v1441, %v1446
    %v1451 = vlaneseq
    %v1452 = vshrl.u32 %v1451, 7
    %v1453 = vsub.s32 0, %v1452
    %v1454 = vrot.slane %v1415, %v1453
    %v1456 = vadd.f32 %v1448, %v1454
    %v1457 = vadd.f32 %v1449, %v1454
    %1458 = vst.msk [vmem:[#allocation2] sm:$0xff] %vm155, %v1456
    %1459 = vst.msk [vmem:[#allocation2 + $0x8] sm:$0xff] %vm155, %v1457
    // Predicated region
    $region94: #{bert_for_masked_lm.1} parent=1 // pred_check
      %p1460 = pneg %p73
    $region95: #{bert_for_masked_lm.1} parent=1 // pred_check_branch
      %1462 = sbr.rel (%p1460) target = $region97
    $region96: #{bert_for_masked_lm.1} parent=1 // pred_region
      %v1463 = vld [vmem:[%s16] sm:$0xf]
      %v1464 = vld [vmem:[%s16 + $0x4] sm:$0xf]
      %v1465 = vld [vmem:[%s16 + $0x8] sm:$0xf]
      %v1466 = vld [vmem:[%s16 + $0xc] sm:$0xf]
      %v1467 = vpack.c.bf16 %v1457, %v1456
      %v1468 = vld [vmem:[%s17] sm:$0x1]
      %v1470 = vlaneseq
      %v1471 = vshrl.u32 %v1470, 7
      %v1472 = vsub.s32 0, %v1471
      %v1473 = vrot.slane %v1468, %v1472
      %v1479 = vunpack.c.l.b16 %v1463
      %v1480 = vunpack.c.l.b16 %v1464
      %v1481 = vunpack.c.l.b16 %v1465
      %v1482 = vunpack.c.l.b16 %v1466
      %v1483 = vpack.c.b16 %v1480, %v1479
      %v1484 = vpack.c.b16 %v1482, %v1481
      %v1488 = vsel %vm155, %v1467, 0
      %1490 = vmatprep.subr.bf16.mxu0 0
      %1491 = vmatpush1.bf16.msra.mxu0 %v1483
      %1492 = vmatprep.subr.bf16.mxu0 0
      %1493 = vmatpush1.bf16.msra.mxu0 %v1484
      %1494 = vmatprep.subr.bf16.mxu0 0
      %1495 = vmatpush1.bf16.msra.mxu0 0
      %1496 = vmatprep.subr.bf16.mxu0 0
      %1497 = vmatpush1.bf16.msra.mxu0 0
      %1498 = vmatprep.subr.bf16.mxu0 0
      %1499 = vmatpush1.bf16.msra.mxu0 0
      %1500 = vmatprep.subr.bf16.mxu0 0
      %1501 = vmatpush1.bf16.msra.mxu0 0
      %1502 = vmatprep.subr.bf16.mxu0 0
      %1503 = vmatpush1.bf16.msra.mxu0 0
      %1504 = vmatprep.subr.bf16.mxu0 0
      %1505 = vmatpush1.bf16.msra.mxu0 0
      %1506 = vmatprep.subr.bf16.mxu0 0
      %1507 = vmatpush1.bf16.msra.mxu0 0
      %1508 = vmatprep.subr.bf16.mxu0 0
      %1509 = vmatpush1.bf16.msra.mxu0 0
      %1510 = vmatprep.subr.bf16.mxu0 0
      %1511 = vmatpush1.bf16.msra.mxu0 0
      %1512 = vmatprep.subr.bf16.mxu0 0
      %1513 = vmatpush1.bf16.msra.mxu0 0
      %1514 = vmatprep.subr.bf16.mxu0 0
      %1515 = vmatpush1.bf16.msra.mxu0 0
      %1516 = vmatprep.subr.bf16.mxu0 0
      %1517 = vmatpush1.bf16.msra.mxu0 0
      %1518 = vmatprep.subr.bf16.mxu0 0
      %1519 = vmatpush1.bf16.msra.mxu0 0
      %1520 = vmatprep.subr.bf16.mxu0 0
      %1521 = vmatpush1.bf16.msra.mxu0 0
      %1522 = vmatprep.mubr.bf16.mxu0 0
      %1523 = vmatmul.mubr.bf16.gmra.mrb[0].mxu0 %v1488
      %v1524 = vpop.f32.mrb[0].mxu0
      %v1525 = vadd.f32 %v1473, %v1524
      %v1526 = vpop.f32.mrb[0].mxu0
      %v1527 = vpop.f32.mrb[0].mxu0
      %v1528 = vadd.f32 %v1473, %v1527
      %v1529 = vpop.f32.mrb[0].mxu0
      %1530 = vdwg.mxu0
      %v1531 = vmul.f32 %v1525, 0.5
      %v1532 = vmul.f32 %v1528, 0.5
      %v1533 = vmul.f32 %v1525, 0.044715
      %v1534 = vmul.f32 %v1528, 0.044715
      %v1535 = vmul.f32 %v1533, %v1525
      %v1536 = vmul.f32 %v1534, %v1528
      %v1537 = vmul.f32 %v1535, %v1525
      %v1538 = vmul.f32 %v1536, %v1528
      %v1539 = vadd.f32 %v1525, %v1537
      %v1540 = vadd.f32 %v1528, %v1538
      %v1541 = vmul.f32 %v1539, 0.7978846
      %v1542 = vmul.f32 %v1540, 0.7978846
      %v1543 = vtanh.pop %v1541
      %v1544 = vtanh.pop %v1542
      %v1545 = vadd.f32 %v1543, 1.0
      %v1546 = vadd.f32 %v1544, 1.0
      %v1547 = vmul.f32 %v1531, %v1545
      %v1548 = vmul.f32 %v1532, %v1546
      %v1549 = vld [vmem:[%s18] sm:$0x1]
      %v1550 = vld [vmem:[%s19] sm:$0x1]
      %v1551 = vsel %vm155, %v1547, 0.0
      %1552 = vadd.xlane.f32.xlu0 %v1551
      %v1553 = vpop.xlane.xlu0 %1552
      %v1554 = vsel %vm155, %v1548, 0.0
      %1555 = vadd.xlane.f32.xlu0 %v1554
      %v1556 = vpop.xlane.xlu0 %1555
      %v1557 = vmul.f32 %v1553, %v1204
      %v1558 = vmul.f32 %v1556, %v1204
      %v1559 = vsub.f32 %v1547, %v1557
      %v1560 = vsub.f32 %v1548, %v1558
      %v1561 = vmul.f32 %v1559, %v1559
      %v1562 = vmul.f32 %v1560, %v1560
      %v1563 = vsel %vm155, %v1561, 0.0
      %1564 = vadd.xlane.f32.xlu0 %v1563
      %v1565 = vpop.xlane.xlu0 %1564
      %v1566 = vsel %vm155, %v1562, 0.0
      %1567 = vadd.xlane.f32.xlu0 %v1566
      %v1568 = vpop.xlane.xlu0 %1567
      %v1569 = vmul.f32 %v1565, %v1204
      %v1570 = vmul.f32 %v1568, %v1204
      %v1571 = vadd.f32 %v1569, 1e-12
      %v1572 = vadd.f32 %v1570, 1e-12
      %v1573 = vrsqrt.pop %v1571
      %v1574 = vrsqrt.pop %v1572
      %v1575 = vmul.f32 %v1559, %v1573
      %v1576 = vmul.f32 %v1560, %v1574
      %v1578 = vlaneseq
      %v1579 = vshrl.u32 %v1578, 7
      %v1580 = vsub.s32 0, %v1579
      %v1581 = vrot.slane %v1549, %v1580
      %v1583 = vmul.f32 %v1575, %v1581
      %v1584 = vmul.f32 %v1576, %v1581
      %v1586 = vlaneseq
      %v1587 = vshrl.u32 %v1586, 7
      %v1588 = vsub.s32 0, %v1587
      %v1589 = vrot.slane %v1550, %v1588
      %v1591 = vadd.f32 %v1583, %v1589
      %v1592 = vadd.f32 %v1584, %v1589
      %v1593 = vld [vmem:[%s20] sm:$0xf]
      %v1594 = vld [vmem:[%s20 + $0x4] sm:$0xf]
      %v1595 = vld [vmem:[%s20 + $0x8] sm:$0xf]
      %v1596 = vld [vmem:[%s20 + $0xc] sm:$0xf]
      %v1597 = vpack.c.bf16 %v1592, %v1591
      %v1598 = vld [vmem:[%s21] sm:$0x1]
      %v1600 = vlaneseq
      %v1601 = vshrl.u32 %v1600, 7
      %v1602 = vsub.s32 0, %v1601
      %v1603 = vrot.slane %v1598, %v1602
      %v1609 = vunpack.c.l.b16 %v1593
      %v1610 = vunpack.c.l.b16 %v1594
      %v1611 = vunpack.c.l.b16 %v1595
      %v1612 = vunpack.c.l.b16 %v1596
      %v1613 = vpack.c.b16 %v1610, %v1609
      %v1614 = vpack.c.b16 %v1612, %v1611
      %v1618 = vsel %vm155, %v1597, 0
      %1620 = vmatprep.subr.bf16.mxu0 0
      %1621 = vmatpush1.bf16.msra.mxu0 %v1613
      %1622 = vmatprep.subr.bf16.mxu0 0
      %1623 = vmatpush1.bf16.msra.mxu0 %v1614
      %1624 = vmatprep.subr.bf16.mxu0 0
      %1625 = vmatpush1.bf16.msra.mxu0 0
      %1626 = vmatprep.subr.bf16.mxu0 0
      %1627 = vmatpush1.bf16.msra.mxu0 0
      %1628 = vmatprep.subr.bf16.mxu0 0
      %1629 = vmatpush1.bf16.msra.mxu0 0
      %1630 = vmatprep.subr.bf16.mxu0 0
      %1631 = vmatpush1.bf16.msra.mxu0 0
      %1632 = vmatprep.subr.bf16.mxu0 0
      %1633 = vmatpush1.bf16.msra.mxu0 0
      %1634 = vmatprep.subr.bf16.mxu0 0
      %1635 = vmatpush1.bf16.msra.mxu0 0
      %1636 = vmatprep.subr.bf16.mxu0 0
      %1637 = vmatpush1.bf16.msra.mxu0 0
      %1638 = vmatprep.subr.bf16.mxu0 0
      %1639 = vmatpush1.bf16.msra.mxu0 0
      %1640 = vmatprep.subr.bf16.mxu0 0
      %1641 = vmatpush1.bf16.msra.mxu0 0
      %1642 = vmatprep.subr.bf16.mxu0 0
      %1643 = vmatpush1.bf16.msra.mxu0 0
      %1644 = vmatprep.subr.bf16.mxu0 0
      %1645 = vmatpush1.bf16.msra.mxu0 0
      %1646 = vmatprep.subr.bf16.mxu0 0
      %1647 = vmatpush1.bf16.msra.mxu0 0
      %1648 = vmatprep.subr.bf16.mxu0 0
      %1649 = vmatpush1.bf16.msra.mxu0 0
      %1650 = vmatprep.subr.bf16.mxu0 0
      %1651 = vmatpush1.bf16.msra.mxu0 0
      %1652 = vmatprep.mubr.bf16.mxu0 0
      %1653 = vmatmul.mubr.bf16.gmra.mrb[0].mxu0 %v1618
      %v1654 = vpop.f32.mrb[0].mxu0
      %v1655 = vadd.f32 %v1603, %v1654
      %v1656 = vpop.f32.mrb[0].mxu0
      %v1657 = vpop.f32.mrb[0].mxu0
      %v1658 = vadd.f32 %v1603, %v1657
      %v1659 = vpop.f32.mrb[0].mxu0
      %1660 = vdwg.mxu0
      %1661 = vst [vmem:[#allocation3] sm:$0xff] %v1655
      %1662 = vst [vmem:[#allocation3 + $0x8] sm:$0xff] %v1658
    $region97: #{bert_for_masked_lm.1} parent=1 // pred_fallthru
      _
    // Predicated region
    $region98: #{bert_for_masked_lm.1} parent=1 // pred_check
      _
    $region99: #{bert_for_masked_lm.1} parent=1 // pred_check_branch
      %1664 = sbr.rel (0) target = $region101
    $region100: #{bert_for_masked_lm.1} parent=1 // pred_region
      %s1666 = ssub.s32 256, 256
      %1667 = vsyncadd [#allocation4], %s1666
      %s1668 = sshll.u32 [#allocation3], 4
      %s1669 = int_to_ptr.vmem [resolvable:$true] %s1668
      %1674 = dma.vmem_to_hbm [thread:$0]  %s1669, 256, %s22, [#allocation4], 128, 128, 8
    $region101: #{bert_for_masked_lm.1} parent=1 // pred_fallthru
      _
    // Predicated region
    $region102: #{bert_for_masked_lm.1} parent=1 // pred_check
      _
    $region103: #{bert_for_masked_lm.1} parent=1 // pred_check_branch
      %1676 = sbr.rel (0) target = $region105
    $region104: #{bert_for_masked_lm.1} parent=1 // pred_region
      %1677 = dma.done [#allocation4], 256
    $region105: #{bert_for_masked_lm.1} parent=1 // pred_fallthru
      _
    %1678 = vsyncpa [#allocation4], 1

</llo_original>
